<compile_context>
chip_gen: v5e
topology: v5e:2x2
jax: 0.10.0
libtpu: 0.0.40
codegen_flags: <defaults>
</compile_context>

<pallas_src>
import jax
import jax.numpy as jnp
from jax.experimental import pallas as pl
from jax.experimental.pallas import tpu as pltpu


# ---------------------------------------------------------------------------
# In-kernel helpers (value-level, run on VMEM/vregs)
# ---------------------------------------------------------------------------
def _conv1d_same_relu(x, w_col, b, K):
    """'same'-padded Conv1d + bias + ReLU on one (C_in, L) feature map.

    im2col: K shifted length-slices stacked along channels, then one
    (C_out, K*C_in) @ (K*C_in, L) MXU matmul.  L stays on the lane axis.
    """
    C_in, L = x.shape
    pad_l = (K - 1) // 2
    pad_r = (K - 1) - pad_l  # PyTorch padding='same' puts the extra pad on the right
    parts = []
    if pad_l:
        parts.append(jnp.zeros((C_in, pad_l), jnp.float32))
    parts.append(x)
    if pad_r:
        parts.append(jnp.zeros((C_in, pad_r), jnp.float32))
    xpad = jnp.concatenate(parts, axis=1) if len(parts) > 1 else x
    xcol = jnp.concatenate([xpad[:, k:k + L] for k in range(K)], axis=0)  # (K*C_in, L)
    y = jnp.dot(w_col, xcol, preferred_element_type=jnp.float32) + b
    return jnp.maximum(y, 0.0)


def _avgpool1d(y, pool):
    """AvgPool1d(kernel=stride=pool, remainder dropped) as one MXU matmul."""
    C, L = y.shape
    L_out = L // pool
    rows = jax.lax.broadcasted_iota(jnp.int32, (L, L_out), 0)
    cols = jax.lax.broadcasted_iota(jnp.int32, (L, L_out), 1)
    in_win = jnp.logical_and(rows >= cols * pool, rows < (cols + 1) * pool)
    pool_mat = jnp.where(in_win, 1.0 / pool, 0.0).astype(jnp.float32)
    return jnp.dot(y, pool_mat, preferred_element_type=jnp.float32)


# ---------------------------------------------------------------------------
# Fused whole-network kernel (one grid step = one batch element)
# ---------------------------------------------------------------------------
def _make_densenet_kernel(plan):
    def kernel(*refs):
        x_ref, w_refs, o_ref = refs[0], refs[1:-1], refs[-1]
        feats = x_ref[0].astype(jnp.float32)  # (C, L): channels on sublanes, L on lanes
        wi = 0
        for op in plan:
            if op[0] == "dense_layer":
                K = op[1]
                w1 = w_refs[wi][...].astype(jnp.float32)
                b1 = w_refs[wi + 1][...].astype(jnp.float32)
                w2 = w_refs[wi + 2][...].astype(jnp.float32)
                b2 = w_refs[wi + 3][...].astype(jnp.float32)
                wi += 4
                h = _conv1d_same_relu(feats, w1, b1, K)
                out = _conv1d_same_relu(h, w2, b2, K)
                # TODO(synk): nn.Dropout(p=drop_rate) is identity at inference (eval()).
                feats = jnp.concatenate([feats, out], axis=0)  # channel concat, stays in VMEM
            else:  # ("transition", pool): 1x1 conv + ReLU + AvgPool1d
                pool = op[1]
                w = w_refs[wi][...].astype(jnp.float32)
                b = w_refs[wi + 1][...].astype(jnp.float32)
                wi += 2
                y = jnp.maximum(
                    jnp.dot(w, feats, preferred_element_type=jnp.float32) + b, 0.0)
                feats = _avgpool1d(y, pool)
        o_ref[0] = feats.astype(o_ref.dtype)

    return kernel


# ---------------------------------------------------------------------------
# Wrapper: one pallas_call for the whole forward pass
# ---------------------------------------------------------------------------
def basic_densenet_fwd(x, net):
    """x: (N, C_in, L) NCL like PyTorch.  net: dict from build_basic_densenet."""
    N, C0, L0 = x.shape
    C_f, L_f = net["out_channels"], net["out_len"]
    params = net["params"]

    in_specs = [pl.BlockSpec((1, C0, L0), lambda n: (n, 0, 0))]
    in_specs += [pl.BlockSpec(p.shape, lambda n: (0, 0)) for p in params]  # all params 2D

    return pl.pallas_call(
        _make_densenet_kernel(net["plan"]),
        out_shape=jax.ShapeDtypeStruct((N, C_f, L_f), x.dtype),
        grid=(N,),
        in_specs=in_specs,
        out_specs=pl.BlockSpec((1, C_f, L_f), lambda n: (n, 0, 0)),
        compiler_params=pltpu.CompilerParams(
            dimension_semantics=("parallel",)),  # shard batch across TCs (megacore / v7x)
    )(x, *params)


# ---------------------------------------------------------------------------
# Deterministic parameter construction (mirrors BasicDenseNet.__init__)
# ---------------------------------------------------------------------------
def _init_conv(key, c_in, c_out, k):
    """PyTorch Conv1d default init: U(-1/sqrt(fan_in), 1/sqrt(fan_in)).

    Returns the weight already in im2col layout (C_out, K*C_in) with
    W_col[co, k*C_in + ci] == w_pt[co, ci, k], and bias as (C_out, 1).
    """
    kw, kb = jax.random.split(key)
    bound = 1.0 / float(c_in * k) ** 0.5
    w = jax.random.uniform(kw, (c_out, c_in, k), jnp.float32, -bound, bound)
    b = jax.random.uniform(kb, (c_out,), jnp.float32, -bound, bound)
    w_col = jnp.transpose(w, (0, 2, 1)).reshape(c_out, k * c_in)
    return w_col, b.reshape(c_out, 1)


def build_basic_densenet(key, input_dim, layers, growth_rates, R, conv_kernels=3,
                         compression=2, pool_kernels=2, omit_final_transition=True):
    n = len(layers)
    growth_rates = growth_rates if isinstance(growth_rates, list) else [growth_rates] * n
    R = R if isinstance(R, list) else [R] * n
    conv_kernels = conv_kernels if isinstance(conv_kernels, list) else [conv_kernels] * n
    compression = compression if isinstance(compression, list) else [compression] * n
    pool_kernels = pool_kernels if isinstance(pool_kernels, list) else [pool_kernels] * n

    plan, params = [], []
    c_in, len_in = input_dim
    for i in range(n):
        for layer_idx in range(layers[i]):
            cin_l = c_in + layer_idx * growth_rates[i]
            key, k1, k2 = jax.random.split(key, 3)
            w1, b1 = _init_conv(k1, cin_l, growth_rates[i] * R[i], conv_kernels[i])
            w2, b2 = _init_conv(k2, growth_rates[i] * R[i], growth_rates[i], conv_kernels[i])
            plan.append(("dense_layer", conv_kernels[i]))
            params += [w1, b1, w2, b2]
        c_in = c_in + layers[i] * growth_rates[i]
        if i < n - 1 or not omit_final_transition:
            key, kt = jax.random.split(key)
            wt, bt = _init_conv(kt, c_in, c_in // compression[i], 1)
            plan.append(("transition", pool_kernels[i]))
            params += [wt, bt]
            c_in = c_in // compression[i]
            len_in = len_in // pool_kernels[i]
    return {"plan": plan, "params": params, "out_channels": c_in, "out_len": len_in}


# ---------------------------------------------------------------------------
if __name__ == "__main__":
    key = jax.random.PRNGKey(0)
    key, xkey, pkey = jax.random.split(key, 3)

    # Small config: input_dim=(4, 16), layers=[2, 2], growth=4, R=1, k=3, pool=2.
    N, C0, L0 = 2, 4, 16
    x = jax.random.normal(xkey, (N, C0, L0), jnp.float32)  # NCL like PyTorch

    net = build_basic_densenet(
        pkey, input_dim=(C0, L0), layers=[2, 2], growth_rates=4, R=1,
        conv_kernels=3, compression=2, pool_kernels=2, omit_final_transition=True)

    y = jax.block_until_ready(basic_densenet_fwd(x, net))

    # Block0: 4 + 2*4 = 12 ch; transition -> 6 ch, L 16->8; Block1: 6 + 2*4 = 14 ch.
    assert y.shape == (N, net["out_channels"], net["out_len"]) == (2, 14, 8), y.shape
    assert bool(jnp.all(jnp.isfinite(y)))
    print("KERNEL_OK")
</pallas_src>

<mosaic_0001>
module attributes {stable_mosaic.version = 11 : i64} {
  func.func @kernel(%arg0: i32, %arg1: memref<1x4x16xf32, #tpu.memory_space<vmem>>, %arg2: memref<4x12xf32, #tpu.memory_space<vmem>>, %arg3: memref<4x1xf32, #tpu.memory_space<vmem>>, %arg4: memref<4x12xf32, #tpu.memory_space<vmem>>, %arg5: memref<4x1xf32, #tpu.memory_space<vmem>>, %arg6: memref<4x24xf32, #tpu.memory_space<vmem>>, %arg7: memref<4x1xf32, #tpu.memory_space<vmem>>, %arg8: memref<4x12xf32, #tpu.memory_space<vmem>>, %arg9: memref<4x1xf32, #tpu.memory_space<vmem>>, %arg10: memref<6x12xf32, #tpu.memory_space<vmem>>, %arg11: memref<6x1xf32, #tpu.memory_space<vmem>>, %arg12: memref<4x18xf32, #tpu.memory_space<vmem>>, %arg13: memref<4x1xf32, #tpu.memory_space<vmem>>, %arg14: memref<4x12xf32, #tpu.memory_space<vmem>>, %arg15: memref<4x1xf32, #tpu.memory_space<vmem>>, %arg16: memref<4x30xf32, #tpu.memory_space<vmem>>, %arg17: memref<4x1xf32, #tpu.memory_space<vmem>>, %arg18: memref<4x12xf32, #tpu.memory_space<vmem>>, %arg19: memref<4x1xf32, #tpu.memory_space<vmem>>, %arg20: memref<1x14x8xf32, #tpu.memory_space<vmem>>) attributes {dimension_semantics = [#tpu.dimension_semantics<parallel>], iteration_bounds = array<i64: 2>, scalar_prefetch = 0 : i64, scratch_operands = 0 : i64, tpu.core_type = #tpu.core_type<tc>, window_params = [{transform_indices = @transform_0, window_bounds = array<i64: 1, 4, 16>}, {pipeline_mode = #tpu.pipeline_mode<synchronous>, transform_indices = @transform_1, window_bounds = array<i64: 4, 12>}, {pipeline_mode = #tpu.pipeline_mode<synchronous>, transform_indices = @transform_2, window_bounds = array<i64: 4, 1>}, {pipeline_mode = #tpu.pipeline_mode<synchronous>, transform_indices = @transform_3, window_bounds = array<i64: 4, 12>}, {pipeline_mode = #tpu.pipeline_mode<synchronous>, transform_indices = @transform_4, window_bounds = array<i64: 4, 1>}, {pipeline_mode = #tpu.pipeline_mode<synchronous>, transform_indices = @transform_5, window_bounds = array<i64: 4, 24>}, {pipeline_mode = #tpu.pipeline_mode<synchronous>, transform_indices = @transform_6, window_bounds = array<i64: 4, 1>}, {pipeline_mode = #tpu.pipeline_mode<synchronous>, transform_indices = @transform_7, window_bounds = array<i64: 4, 12>}, {pipeline_mode = #tpu.pipeline_mode<synchronous>, transform_indices = @transform_8, window_bounds = array<i64: 4, 1>}, {pipeline_mode = #tpu.pipeline_mode<synchronous>, transform_indices = @transform_9, window_bounds = array<i64: 6, 12>}, {pipeline_mode = #tpu.pipeline_mode<synchronous>, transform_indices = @transform_10, window_bounds = array<i64: 6, 1>}, {pipeline_mode = #tpu.pipeline_mode<synchronous>, transform_indices = @transform_11, window_bounds = array<i64: 4, 18>}, {pipeline_mode = #tpu.pipeline_mode<synchronous>, transform_indices = @transform_12, window_bounds = array<i64: 4, 1>}, {pipeline_mode = #tpu.pipeline_mode<synchronous>, transform_indices = @transform_13, window_bounds = array<i64: 4, 12>}, {pipeline_mode = #tpu.pipeline_mode<synchronous>, transform_indices = @transform_14, window_bounds = array<i64: 4, 1>}, {pipeline_mode = #tpu.pipeline_mode<synchronous>, transform_indices = @transform_15, window_bounds = array<i64: 4, 30>}, {pipeline_mode = #tpu.pipeline_mode<synchronous>, transform_indices = @transform_16, window_bounds = array<i64: 4, 1>}, {pipeline_mode = #tpu.pipeline_mode<synchronous>, transform_indices = @transform_17, window_bounds = array<i64: 4, 12>}, {pipeline_mode = #tpu.pipeline_mode<synchronous>, transform_indices = @transform_18, window_bounds = array<i64: 4, 1>}, {transform_indices = @transform_19, window_bounds = array<i64: 1, 14, 8>}]} {
    %c0 = arith.constant 0 : index
    %c0_0 = arith.constant 0 : index
    %c0_1 = arith.constant 0 : index
    %0 = vector.load %arg1[%c0, %c0_0, %c0_1] : memref<1x4x16xf32, #tpu.memory_space<vmem>>, vector<1x4x16xf32>
    %1 = vector.shape_cast %0 : vector<1x4x16xf32> to vector<4x16xf32>
    %c0_2 = arith.constant 0 : index
    %c0_3 = arith.constant 0 : index
    %2 = vector.load %arg2[%c0_2, %c0_3] : memref<4x12xf32, #tpu.memory_space<vmem>>, vector<4x12xf32>
    %c0_4 = arith.constant 0 : index
    %c0_5 = arith.constant 0 : index
    %3 = vector.load %arg3[%c0_4, %c0_5] : memref<4x1xf32, #tpu.memory_space<vmem>>, vector<4x1xf32>
    %c0_6 = arith.constant 0 : index
    %c0_7 = arith.constant 0 : index
    %4 = vector.load %arg4[%c0_6, %c0_7] : memref<4x12xf32, #tpu.memory_space<vmem>>, vector<4x12xf32>
    %c0_8 = arith.constant 0 : index
    %c0_9 = arith.constant 0 : index
    %5 = vector.load %arg5[%c0_8, %c0_9] : memref<4x1xf32, #tpu.memory_space<vmem>>, vector<4x1xf32>
    %cst = arith.constant 0.000000e+00 : f32
    %6 = vector.broadcast %cst : f32 to vector<4x1xf32>
    %cst_10 = arith.constant 0.000000e+00 : f32
    %7 = vector.broadcast %cst_10 : f32 to vector<4x1xf32>
    %8 = tpu.concatenate %6, %1, %7 in 1 : vector<4x1xf32>, vector<4x16xf32>, vector<4x1xf32> -> vector<4x18xf32>
    %9 = vector.extract_strided_slice %8 {offsets = [0, 0], sizes = [4, 16], strides = [1, 1]} : vector<4x18xf32> to vector<4x16xf32>
    %10 = vector.extract_strided_slice %8 {offsets = [0, 1], sizes = [4, 16], strides = [1, 1]} : vector<4x18xf32> to vector<4x16xf32>
    %11 = vector.extract_strided_slice %8 {offsets = [0, 2], sizes = [4, 16], strides = [1, 1]} : vector<4x18xf32> to vector<4x16xf32>
    %12 = tpu.concatenate %9, %10, %11 in 0 : vector<4x16xf32>, vector<4x16xf32>, vector<4x16xf32> -> vector<12x16xf32>
    %cst_11 = arith.constant dense<0.000000e+00> : vector<4x16xf32>
    %13 = tpu.matmul %2, %12, %cst_11 {dimension_numbers = #tpu.dot_dimension_numbers<[1], [0], [0], [1], [0, 0, 1, 1], [], []>} : vector<4x12xf32>, vector<12x16xf32>, vector<4x16xf32> -> vector<4x16xf32>
    %14 = vector.broadcast %3 : vector<4x1xf32> to vector<4x16xf32>
    %15 = arith.addf %13, %14 : vector<4x16xf32>
    %cst_12 = arith.constant 0.000000e+00 : f32
    %16 = vector.broadcast %cst_12 : f32 to vector<4x16xf32>
    %17 = arith.maximumf %15, %16 : vector<4x16xf32>
    %cst_13 = arith.constant 0.000000e+00 : f32
    %18 = vector.broadcast %cst_13 : f32 to vector<4x1xf32>
    %cst_14 = arith.constant 0.000000e+00 : f32
    %19 = vector.broadcast %cst_14 : f32 to vector<4x1xf32>
    %20 = tpu.concatenate %18, %17, %19 in 1 : vector<4x1xf32>, vector<4x16xf32>, vector<4x1xf32> -> vector<4x18xf32>
    %21 = vector.extract_strided_slice %20 {offsets = [0, 0], sizes = [4, 16], strides = [1, 1]} : vector<4x18xf32> to vector<4x16xf32>
    %22 = vector.extract_strided_slice %20 {offsets = [0, 1], sizes = [4, 16], strides = [1, 1]} : vector<4x18xf32> to vector<4x16xf32>
    %23 = vector.extract_strided_slice %20 {offsets = [0, 2], sizes = [4, 16], strides = [1, 1]} : vector<4x18xf32> to vector<4x16xf32>
    %24 = tpu.concatenate %21, %22, %23 in 0 : vector<4x16xf32>, vector<4x16xf32>, vector<4x16xf32> -> vector<12x16xf32>
    %cst_15 = arith.constant dense<0.000000e+00> : vector<4x16xf32>
    %25 = tpu.matmul %4, %24, %cst_15 {dimension_numbers = #tpu.dot_dimension_numbers<[1], [0], [0], [1], [0, 0, 1, 1], [], []>} : vector<4x12xf32>, vector<12x16xf32>, vector<4x16xf32> -> vector<4x16xf32>
    %26 = vector.broadcast %5 : vector<4x1xf32> to vector<4x16xf32>
    %27 = arith.addf %25, %26 : vector<4x16xf32>
    %cst_16 = arith.constant 0.000000e+00 : f32
    %28 = vector.broadcast %cst_16 : f32 to vector<4x16xf32>
    %29 = arith.maximumf %27, %28 : vector<4x16xf32>
    %30 = tpu.concatenate %1, %29 in 0 : vector<4x16xf32>, vector<4x16xf32> -> vector<8x16xf32>
    %c0_17 = arith.constant 0 : index
    %c0_18 = arith.constant 0 : index
    %31 = vector.load %arg6[%c0_17, %c0_18] : memref<4x24xf32, #tpu.memory_space<vmem>>, vector<4x24xf32>
    %c0_19 = arith.constant 0 : index
    %c0_20 = arith.constant 0 : index
    %32 = vector.load %arg7[%c0_19, %c0_20] : memref<4x1xf32, #tpu.memory_space<vmem>>, vector<4x1xf32>
    %c0_21 = arith.constant 0 : index
    %c0_22 = arith.constant 0 : index
    %33 = vector.load %arg8[%c0_21, %c0_22] : memref<4x12xf32, #tpu.memory_space<vmem>>, vector<4x12xf32>
    %c0_23 = arith.constant 0 : index
    %c0_24 = arith.constant 0 : index
    %34 = vector.load %arg9[%c0_23, %c0_24] : memref<4x1xf32, #tpu.memory_space<vmem>>, vector<4x1xf32>
    %cst_25 = arith.constant 0.000000e+00 : f32
    %35 = vector.broadcast %cst_25 : f32 to vector<8x1xf32>
    %cst_26 = arith.constant 0.000000e+00 : f32
    %36 = vector.broadcast %cst_26 : f32 to vector<8x1xf32>
    %37 = tpu.concatenate %35, %30, %36 in 1 : vector<8x1xf32>, vector<8x16xf32>, vector<8x1xf32> -> vector<8x18xf32>
    %38 = vector.extract_strided_slice %37 {offsets = [0, 0], sizes = [8, 16], strides = [1, 1]} : vector<8x18xf32> to vector<8x16xf32>
    %39 = vector.extract_strided_slice %37 {offsets = [0, 1], sizes = [8, 16], strides = [1, 1]} : vector<8x18xf32> to vector<8x16xf32>
    %40 = vector.extract_strided_slice %37 {offsets = [0, 2], sizes = [8, 16], strides = [1, 1]} : vector<8x18xf32> to vector<8x16xf32>
    %41 = tpu.concatenate %38, %39, %40 in 0 : vector<8x16xf32>, vector<8x16xf32>, vector<8x16xf32> -> vector<24x16xf32>
    %cst_27 = arith.constant dense<0.000000e+00> : vector<4x16xf32>
    %42 = tpu.matmul %31, %41, %cst_27 {dimension_numbers = #tpu.dot_dimension_numbers<[1], [0], [0], [1], [0, 0, 1, 1], [], []>} : vector<4x24xf32>, vector<24x16xf32>, vector<4x16xf32> -> vector<4x16xf32>
    %43 = vector.broadcast %32 : vector<4x1xf32> to vector<4x16xf32>
    %44 = arith.addf %42, %43 : vector<4x16xf32>
    %cst_28 = arith.constant 0.000000e+00 : f32
    %45 = vector.broadcast %cst_28 : f32 to vector<4x16xf32>
    %46 = arith.maximumf %44, %45 : vector<4x16xf32>
    %cst_29 = arith.constant 0.000000e+00 : f32
    %47 = vector.broadcast %cst_29 : f32 to vector<4x1xf32>
    %cst_30 = arith.constant 0.000000e+00 : f32
    %48 = vector.broadcast %cst_30 : f32 to vector<4x1xf32>
    %49 = tpu.concatenate %47, %46, %48 in 1 : vector<4x1xf32>, vector<4x16xf32>, vector<4x1xf32> -> vector<4x18xf32>
    %50 = vector.extract_strided_slice %49 {offsets = [0, 0], sizes = [4, 16], strides = [1, 1]} : vector<4x18xf32> to vector<4x16xf32>
    %51 = vector.extract_strided_slice %49 {offsets = [0, 1], sizes = [4, 16], strides = [1, 1]} : vector<4x18xf32> to vector<4x16xf32>
    %52 = vector.extract_strided_slice %49 {offsets = [0, 2], sizes = [4, 16], strides = [1, 1]} : vector<4x18xf32> to vector<4x16xf32>
    %53 = tpu.concatenate %50, %51, %52 in 0 : vector<4x16xf32>, vector<4x16xf32>, vector<4x16xf32> -> vector<12x16xf32>
    %cst_31 = arith.constant dense<0.000000e+00> : vector<4x16xf32>
    %54 = tpu.matmul %33, %53, %cst_31 {dimension_numbers = #tpu.dot_dimension_numbers<[1], [0], [0], [1], [0, 0, 1, 1], [], []>} : vector<4x12xf32>, vector<12x16xf32>, vector<4x16xf32> -> vector<4x16xf32>
    %55 = vector.broadcast %34 : vector<4x1xf32> to vector<4x16xf32>
    %56 = arith.addf %54, %55 : vector<4x16xf32>
    %cst_32 = arith.constant 0.000000e+00 : f32
    %57 = vector.broadcast %cst_32 : f32 to vector<4x16xf32>
    %58 = arith.maximumf %56, %57 : vector<4x16xf32>
    %59 = tpu.concatenate %30, %58 in 0 : vector<8x16xf32>, vector<4x16xf32> -> vector<12x16xf32>
    %c0_33 = arith.constant 0 : index
    %c0_34 = arith.constant 0 : index
    %60 = vector.load %arg10[%c0_33, %c0_34] : memref<6x12xf32, #tpu.memory_space<vmem>>, vector<6x12xf32>
    %c0_35 = arith.constant 0 : index
    %c0_36 = arith.constant 0 : index
    %61 = vector.load %arg11[%c0_35, %c0_36] : memref<6x1xf32, #tpu.memory_space<vmem>>, vector<6x1xf32>
    %cst_37 = arith.constant dense<0.000000e+00> : vector<6x16xf32>
    %62 = tpu.matmul %60, %59, %cst_37 {dimension_numbers = #tpu.dot_dimension_numbers<[1], [0], [0], [1], [0, 0, 1, 1], [], []>} : vector<6x12xf32>, vector<12x16xf32>, vector<6x16xf32> -> vector<6x16xf32>
    %63 = vector.broadcast %61 : vector<6x1xf32> to vector<6x16xf32>
    %64 = arith.addf %62, %63 : vector<6x16xf32>
    %cst_38 = arith.constant 0.000000e+00 : f32
    %65 = vector.broadcast %cst_38 : f32 to vector<6x16xf32>
    %66 = arith.maximumf %64, %65 : vector<6x16xf32>
    %67 = tpu.iota {dimensions = array<i32: 0>} : vector<16x8xi32>
    %68 = tpu.iota {dimensions = array<i32: 1>} : vector<16x8xi32>
    %c2_i32 = arith.constant 2 : i32
    %69 = vector.broadcast %c2_i32 : i32 to vector<16x8xi32>
    %70 = arith.muli %68, %69 : vector<16x8xi32>
    %71 = arith.cmpi sge, %67, %70 : vector<16x8xi32>
    %c1_i32 = arith.constant 1 : i32
    %72 = vector.broadcast %c1_i32 : i32 to vector<16x8xi32>
    %73 = arith.addi %68, %72 : vector<16x8xi32>
    %c2_i32_39 = arith.constant 2 : i32
    %74 = vector.broadcast %c2_i32_39 : i32 to vector<16x8xi32>
    %75 = arith.muli %73, %74 : vector<16x8xi32>
    %76 = arith.cmpi slt, %67, %75 : vector<16x8xi32>
    %77 = arith.andi %71, %76 : vector<16x8xi1>
    %cst_40 = arith.constant 5.000000e-01 : f32
    %cst_41 = arith.constant 0.000000e+00 : f32
    %78 = vector.broadcast %cst_40 : f32 to vector<16x8xf32>
    %79 = vector.broadcast %cst_41 : f32 to vector<16x8xf32>
    %80 = arith.select %77, %78, %79 : vector<16x8xi1>, vector<16x8xf32>
    %cst_42 = arith.constant dense<0.000000e+00> : vector<6x8xf32>
    %81 = tpu.matmul %66, %80, %cst_42 {dimension_numbers = #tpu.dot_dimension_numbers<[1], [0], [0], [1], [0, 0, 1, 1], [], []>} : vector<6x16xf32>, vector<16x8xf32>, vector<6x8xf32> -> vector<6x8xf32>
    %c0_43 = arith.constant 0 : index
    %c0_44 = arith.constant 0 : index
    %82 = vector.load %arg12[%c0_43, %c0_44] : memref<4x18xf32, #tpu.memory_space<vmem>>, vector<4x18xf32>
    %c0_45 = arith.constant 0 : index
    %c0_46 = arith.constant 0 : index
    %83 = vector.load %arg13[%c0_45, %c0_46] : memref<4x1xf32, #tpu.memory_space<vmem>>, vector<4x1xf32>
    %c0_47 = arith.constant 0 : index
    %c0_48 = arith.constant 0 : index
    %84 = vector.load %arg14[%c0_47, %c0_48] : memref<4x12xf32, #tpu.memory_space<vmem>>, vector<4x12xf32>
    %c0_49 = arith.constant 0 : index
    %c0_50 = arith.constant 0 : index
    %85 = vector.load %arg15[%c0_49, %c0_50] : memref<4x1xf32, #tpu.memory_space<vmem>>, vector<4x1xf32>
    %cst_51 = arith.constant 0.000000e+00 : f32
    %86 = vector.broadcast %cst_51 : f32 to vector<6x1xf32>
    %cst_52 = arith.constant 0.000000e+00 : f32
    %87 = vector.broadcast %cst_52 : f32 to vector<6x1xf32>
    %88 = tpu.concatenate %86, %81, %87 in 1 : vector<6x1xf32>, vector<6x8xf32>, vector<6x1xf32> -> vector<6x10xf32>
    %89 = vector.extract_strided_slice %88 {offsets = [0, 0], sizes = [6, 8], strides = [1, 1]} : vector<6x10xf32> to vector<6x8xf32>
    %90 = vector.extract_strided_slice %88 {offsets = [0, 1], sizes = [6, 8], strides = [1, 1]} : vector<6x10xf32> to vector<6x8xf32>
    %91 = vector.extract_strided_slice %88 {offsets = [0, 2], sizes = [6, 8], strides = [1, 1]} : vector<6x10xf32> to vector<6x8xf32>
    %92 = tpu.concatenate %89, %90, %91 in 0 : vector<6x8xf32>, vector<6x8xf32>, vector<6x8xf32> -> vector<18x8xf32>
    %cst_53 = arith.constant dense<0.000000e+00> : vector<4x8xf32>
    %93 = tpu.matmul %82, %92, %cst_53 {dimension_numbers = #tpu.dot_dimension_numbers<[1], [0], [0], [1], [0, 0, 1, 1], [], []>} : vector<4x18xf32>, vector<18x8xf32>, vector<4x8xf32> -> vector<4x8xf32>
    %94 = vector.broadcast %83 : vector<4x1xf32> to vector<4x8xf32>
    %95 = arith.addf %93, %94 : vector<4x8xf32>
    %cst_54 = arith.constant 0.000000e+00 : f32
    %96 = vector.broadcast %cst_54 : f32 to vector<4x8xf32>
    %97 = arith.maximumf %95, %96 : vector<4x8xf32>
    %cst_55 = arith.constant 0.000000e+00 : f32
    %98 = vector.broadcast %cst_55 : f32 to vector<4x1xf32>
    %cst_56 = arith.constant 0.000000e+00 : f32
    %99 = vector.broadcast %cst_56 : f32 to vector<4x1xf32>
    %100 = tpu.concatenate %98, %97, %99 in 1 : vector<4x1xf32>, vector<4x8xf32>, vector<4x1xf32> -> vector<4x10xf32>
    %101 = vector.extract_strided_slice %100 {offsets = [0, 0], sizes = [4, 8], strides = [1, 1]} : vector<4x10xf32> to vector<4x8xf32>
    %102 = vector.extract_strided_slice %100 {offsets = [0, 1], sizes = [4, 8], strides = [1, 1]} : vector<4x10xf32> to vector<4x8xf32>
    %103 = vector.extract_strided_slice %100 {offsets = [0, 2], sizes = [4, 8], strides = [1, 1]} : vector<4x10xf32> to vector<4x8xf32>
    %104 = tpu.concatenate %101, %102, %103 in 0 : vector<4x8xf32>, vector<4x8xf32>, vector<4x8xf32> -> vector<12x8xf32>
    %cst_57 = arith.constant dense<0.000000e+00> : vector<4x8xf32>
    %105 = tpu.matmul %84, %104, %cst_57 {dimension_numbers = #tpu.dot_dimension_numbers<[1], [0], [0], [1], [0, 0, 1, 1], [], []>} : vector<4x12xf32>, vector<12x8xf32>, vector<4x8xf32> -> vector<4x8xf32>
    %106 = vector.broadcast %85 : vector<4x1xf32> to vector<4x8xf32>
    %107 = arith.addf %105, %106 : vector<4x8xf32>
    %cst_58 = arith.constant 0.000000e+00 : f32
    %108 = vector.broadcast %cst_58 : f32 to vector<4x8xf32>
    %109 = arith.maximumf %107, %108 : vector<4x8xf32>
    %110 = tpu.concatenate %81, %109 in 0 : vector<6x8xf32>, vector<4x8xf32> -> vector<10x8xf32>
    %c0_59 = arith.constant 0 : index
    %c0_60 = arith.constant 0 : index
    %111 = vector.load %arg16[%c0_59, %c0_60] : memref<4x30xf32, #tpu.memory_space<vmem>>, vector<4x30xf32>
    %c0_61 = arith.constant 0 : index
    %c0_62 = arith.constant 0 : index
    %112 = vector.load %arg17[%c0_61, %c0_62] : memref<4x1xf32, #tpu.memory_space<vmem>>, vector<4x1xf32>
    %c0_63 = arith.constant 0 : index
    %c0_64 = arith.constant 0 : index
    %113 = vector.load %arg18[%c0_63, %c0_64] : memref<4x12xf32, #tpu.memory_space<vmem>>, vector<4x12xf32>
    %c0_65 = arith.constant 0 : index
    %c0_66 = arith.constant 0 : index
    %114 = vector.load %arg19[%c0_65, %c0_66] : memref<4x1xf32, #tpu.memory_space<vmem>>, vector<4x1xf32>
    %cst_67 = arith.constant 0.000000e+00 : f32
    %115 = vector.broadcast %cst_67 : f32 to vector<10x1xf32>
    %cst_68 = arith.constant 0.000000e+00 : f32
    %116 = vector.broadcast %cst_68 : f32 to vector<10x1xf32>
    %117 = tpu.concatenate %115, %110, %116 in 1 : vector<10x1xf32>, vector<10x8xf32>, vector<10x1xf32> -> vector<10x10xf32>
    %118 = vector.extract_strided_slice %117 {offsets = [0, 0], sizes = [10, 8], strides = [1, 1]} : vector<10x10xf32> to vector<10x8xf32>
    %119 = vector.extract_strided_slice %117 {offsets = [0, 1], sizes = [10, 8], strides = [1, 1]} : vector<10x10xf32> to vector<10x8xf32>
    %120 = vector.extract_strided_slice %117 {offsets = [0, 2], sizes = [10, 8], strides = [1, 1]} : vector<10x10xf32> to vector<10x8xf32>
    %121 = tpu.concatenate %118, %119, %120 in 0 : vector<10x8xf32>, vector<10x8xf32>, vector<10x8xf32> -> vector<30x8xf32>
    %cst_69 = arith.constant dense<0.000000e+00> : vector<4x8xf32>
    %122 = tpu.matmul %111, %121, %cst_69 {dimension_numbers = #tpu.dot_dimension_numbers<[1], [0], [0], [1], [0, 0, 1, 1], [], []>} : vector<4x30xf32>, vector<30x8xf32>, vector<4x8xf32> -> vector<4x8xf32>
    %123 = vector.broadcast %112 : vector<4x1xf32> to vector<4x8xf32>
    %124 = arith.addf %122, %123 : vector<4x8xf32>
    %cst_70 = arith.constant 0.000000e+00 : f32
    %125 = vector.broadcast %cst_70 : f32 to vector<4x8xf32>
    %126 = arith.maximumf %124, %125 : vector<4x8xf32>
    %cst_71 = arith.constant 0.000000e+00 : f32
    %127 = vector.broadcast %cst_71 : f32 to vector<4x1xf32>
    %cst_72 = arith.constant 0.000000e+00 : f32
    %128 = vector.broadcast %cst_72 : f32 to vector<4x1xf32>
    %129 = tpu.concatenate %127, %126, %128 in 1 : vector<4x1xf32>, vector<4x8xf32>, vector<4x1xf32> -> vector<4x10xf32>
    %130 = vector.extract_strided_slice %129 {offsets = [0, 0], sizes = [4, 8], strides = [1, 1]} : vector<4x10xf32> to vector<4x8xf32>
    %131 = vector.extract_strided_slice %129 {offsets = [0, 1], sizes = [4, 8], strides = [1, 1]} : vector<4x10xf32> to vector<4x8xf32>
    %132 = vector.extract_strided_slice %129 {offsets = [0, 2], sizes = [4, 8], strides = [1, 1]} : vector<4x10xf32> to vector<4x8xf32>
    %133 = tpu.concatenate %130, %131, %132 in 0 : vector<4x8xf32>, vector<4x8xf32>, vector<4x8xf32> -> vector<12x8xf32>
    %cst_73 = arith.constant dense<0.000000e+00> : vector<4x8xf32>
    %134 = tpu.matmul %113, %133, %cst_73 {dimension_numbers = #tpu.dot_dimension_numbers<[1], [0], [0], [1], [0, 0, 1, 1], [], []>} : vector<4x12xf32>, vector<12x8xf32>, vector<4x8xf32> -> vector<4x8xf32>
    %135 = vector.broadcast %114 : vector<4x1xf32> to vector<4x8xf32>
    %136 = arith.addf %134, %135 : vector<4x8xf32>
    %cst_74 = arith.constant 0.000000e+00 : f32
    %137 = vector.broadcast %cst_74 : f32 to vector<4x8xf32>
    %138 = arith.maximumf %136, %137 : vector<4x8xf32>
    %139 = tpu.concatenate %110, %138 in 0 : vector<10x8xf32>, vector<4x8xf32> -> vector<14x8xf32>
    %c0_75 = arith.constant 0 : index
    %c0_76 = arith.constant 0 : index
    %c0_77 = arith.constant 0 : index
    %140 = vector.load %arg20[%c0_75, %c0_76, %c0_77] : memref<1x14x8xf32, #tpu.memory_space<vmem>>, vector<1x14x8xf32>
    %141 = vector.shape_cast %140 : vector<1x14x8xf32> to vector<14x8xf32>
    %142 = vector.shape_cast %139 : vector<14x8xf32> to vector<1x14x8xf32>
    tpu.vector_store %arg20[%c0_75, %c0_76, %c0_77], %142 {strides = array<i32>} : memref<1x14x8xf32, #tpu.memory_space<vmem>>, vector<1x14x8xf32>,
    return
  }
  func.func @transform_0(%arg0: i32) -> (i32, i32, i32) {
    %c0_i32 = arith.constant 0 : i32
    %c0_i32_0 = arith.constant 0 : i32
    %c0_i32_1 = arith.constant 0 : i32
    return %arg0, %c0_i32, %c0_i32_0 : i32, i32, i32
  }
  func.func @transform_1(%arg0: i32) -> (i32, i32) {
    %c0_i32 = arith.constant 0 : i32
    %c0_i32_0 = arith.constant 0 : i32
    %c0_i32_1 = arith.constant 0 : i32
    return %c0_i32, %c0_i32_0 : i32, i32
  }
  func.func @transform_2(%arg0: i32) -> (i32, i32) {
    %c0_i32 = arith.constant 0 : i32
    %c0_i32_0 = arith.constant 0 : i32
    %c0_i32_1 = arith.constant 0 : i32
    return %c0_i32, %c0_i32_0 : i32, i32
  }
  func.func @transform_3(%arg0: i32) -> (i32, i32) {
    %c0_i32 = arith.constant 0 : i32
    %c0_i32_0 = arith.constant 0 : i32
    %c0_i32_1 = arith.constant 0 : i32
    return %c0_i32, %c0_i32_0 : i32, i32
  }
  func.func @transform_4(%arg0: i32) -> (i32, i32) {
    %c0_i32 = arith.constant 0 : i32
    %c0_i32_0 = arith.constant 0 : i32
    %c0_i32_1 = arith.constant 0 : i32
    return %c0_i32, %c0_i32_0 : i32, i32
  }
  func.func @transform_5(%arg0: i32) -> (i32, i32) {
    %c0_i32 = arith.constant 0 : i32
    %c0_i32_0 = arith.constant 0 : i32
    %c0_i32_1 = arith.constant 0 : i32
    return %c0_i32, %c0_i32_0 : i32, i32
  }
  func.func @transform_6(%arg0: i32) -> (i32, i32) {
    %c0_i32 = arith.constant 0 : i32
    %c0_i32_0 = arith.constant 0 : i32
    %c0_i32_1 = arith.constant 0 : i32
    return %c0_i32, %c0_i32_0 : i32, i32
  }
  func.func @transform_7(%arg0: i32) -> (i32, i32) {
    %c0_i32 = arith.constant 0 : i32
    %c0_i32_0 = arith.constant 0 : i32
    %c0_i32_1 = arith.constant 0 : i32
    return %c0_i32, %c0_i32_0 : i32, i32
  }
  func.func @transform_8(%arg0: i32) -> (i32, i32) {
    %c0_i32 = arith.constant 0 : i32
    %c0_i32_0 = arith.constant 0 : i32
    %c0_i32_1 = arith.constant 0 : i32
    return %c0_i32, %c0_i32_0 : i32, i32
  }
  func.func @transform_9(%arg0: i32) -> (i32, i32) {
    %c0_i32 = arith.constant 0 : i32
    %c0_i32_0 = arith.constant 0 : i32
    %c0_i32_1 = arith.constant 0 : i32
    return %c0_i32, %c0_i32_0 : i32, i32
  }
  func.func @transform_10(%arg0: i32) -> (i32, i32) {
    %c0_i32 = arith.constant 0 : i32
    %c0_i32_0 = arith.constant 0 : i32
    %c0_i32_1 = arith.constant 0 : i32
    return %c0_i32, %c0_i32_0 : i32, i32
  }
  func.func @transform_11(%arg0: i32) -> (i32, i32) {
    %c0_i32 = arith.constant 0 : i32
    %c0_i32_0 = arith.constant 0 : i32
    %c0_i32_1 = arith.constant 0 : i32
    return %c0_i32, %c0_i32_0 : i32, i32
  }
  func.func @transform_12(%arg0: i32) -> (i32, i32) {
    %c0_i32 = arith.constant 0 : i32
    %c0_i32_0 = arith.constant 0 : i32
    %c0_i32_1 = arith.constant 0 : i32
    return %c0_i32, %c0_i32_0 : i32, i32
  }
  func.func @transform_13(%arg0: i32) -> (i32, i32) {
    %c0_i32 = arith.constant 0 : i32
    %c0_i32_0 = arith.constant 0 : i32
    %c0_i32_1 = arith.constant 0 : i32
    return %c0_i32, %c0_i32_0 : i32, i32
  }
  func.func @transform_14(%arg0: i32) -> (i32, i32) {
    %c0_i32 = arith.constant 0 : i32
    %c0_i32_0 = arith.constant 0 : i32
    %c0_i32_1 = arith.constant 0 : i32
    return %c0_i32, %c0_i32_0 : i32, i32
  }
  func.func @transform_15(%arg0: i32) -> (i32, i32) {
    %c0_i32 = arith.constant 0 : i32
    %c0_i32_0 = arith.constant 0 : i32
    %c0_i32_1 = arith.constant 0 : i32
    return %c0_i32, %c0_i32_0 : i32, i32
  }
  func.func @transform_16(%arg0: i32) -> (i32, i32) {
    %c0_i32 = arith.constant 0 : i32
    %c0_i32_0 = arith.constant 0 : i32
    %c0_i32_1 = arith.constant 0 : i32
    return %c0_i32, %c0_i32_0 : i32, i32
  }
  func.func @transform_17(%arg0: i32) -> (i32, i32) {
    %c0_i32 = arith.constant 0 : i32
    %c0_i32_0 = arith.constant 0 : i32
    %c0_i32_1 = arith.constant 0 : i32
    return %c0_i32, %c0_i32_0 : i32, i32
  }
  func.func @transform_18(%arg0: i32) -> (i32, i32) {
    %c0_i32 = arith.constant 0 : i32
    %c0_i32_0 = arith.constant 0 : i32
    %c0_i32_1 = arith.constant 0 : i32
    return %c0_i32, %c0_i32_0 : i32, i32
  }
  func.func @transform_19(%arg0: i32) -> (i32, i32, i32) {
    %c0_i32 = arith.constant 0 : i32
    %c0_i32_0 = arith.constant 0 : i32
    %c0_i32_1 = arith.constant 0 : i32
    return %arg0, %c0_i32, %c0_i32_0 : i32, i32, i32
  }
}

</mosaic_0001>

<llo_original>
// kernel: tpu_custom_call.1
$region0: #{tpu_custom_call.1}
  #allocation0 [shape = 'u32[]', space=smem, size = 0x4, offset = 0x4, fixed_abs, tag = 'smem constant byte address 0x4 - core index']
  #allocation1 [shape = 'u32[72,128]{1,0:T(1,128)}', space=vmem, size = 0x9000, scoped, tag = 'internal scratch']
  %s0 = inlined_call_operand.vmem [shape: f32[2,4,16], index: 0, kind: input, shape index: {}]
  %s1 = inlined_call_operand.vmem [shape: f32[4,12], index: 1, kind: input, shape index: {}]
  %s2 = inlined_call_operand.vmem [shape: f32[4,1], index: 2, kind: input, shape index: {}]
  %s3 = inlined_call_operand.vmem [shape: f32[4,12], index: 3, kind: input, shape index: {}]
  %s4 = inlined_call_operand.vmem [shape: f32[4,1], index: 4, kind: input, shape index: {}]
  %s5 = inlined_call_operand.vmem [shape: f32[4,24], index: 5, kind: input, shape index: {}]
  %s6 = inlined_call_operand.vmem [shape: f32[4,1], index: 6, kind: input, shape index: {}]
  %s7 = inlined_call_operand.vmem [shape: f32[4,12], index: 7, kind: input, shape index: {}]
  %s8 = inlined_call_operand.vmem [shape: f32[4,1], index: 8, kind: input, shape index: {}]
  %s9 = inlined_call_operand.hbm [shape: f32[6,12], index: 9, kind: input, shape index: {}]
  %s10 = inlined_call_operand.vmem [shape: f32[6,1], index: 10, kind: input, shape index: {}]
  %s11 = inlined_call_operand.vmem [shape: f32[4,18], index: 11, kind: input, shape index: {}]
  %s12 = inlined_call_operand.vmem [shape: f32[4,1], index: 12, kind: input, shape index: {}]
  %s13 = inlined_call_operand.vmem [shape: f32[4,12], index: 13, kind: input, shape index: {}]
  %s14 = inlined_call_operand.vmem [shape: f32[4,1], index: 14, kind: input, shape index: {}]
  %s15 = inlined_call_operand.vmem [shape: f32[4,30], index: 15, kind: input, shape index: {}]
  %s16 = inlined_call_operand.vmem [shape: f32[4,1], index: 16, kind: input, shape index: {}]
  %s17 = inlined_call_operand.vmem [shape: f32[4,12], index: 17, kind: input, shape index: {}]
  %s18 = inlined_call_operand.vmem [shape: f32[4,1], index: 18, kind: input, shape index: {}]
  %s19 = inlined_call_operand.vmem [shape: f32[2,14,8], index: 19, kind: output, shape index: {}]
  %s20 = sld [smem:[#allocation0]]
  $region113: #{tpu_custom_call.1} parent=0
    _
  %s22 = ssub.s32 1, %s20
  %s23 = scalar_select 0, %s22, %s20
  $region1: #{tpu_custom_call.1} parent=0
    #allocation2 [shape = 'u8[4096]{0}', space=vmem, size = 0x1000, scoped, tag = 'input window, operand 9, single buffered']
    #allocation3 [shape = 's32[2]{0}', space=sflag, size = 0x8, scoped, tag = 'scoped memory for tpu_custom_call.1']
    %24 = vsyncpa [#allocation3], 0
    loop: start=0, step=1, limit=4
    $region2: #{tpu_custom_call.1} parent=1 // loop_pre_header
      _
    $region3: #{tpu_custom_call.1} parent=1 // loop_header
      %s26 = sphi 0, %s30
      %p27 = scmp.ge.s32.totalorder %s26, 4
      %s36 = sphi 0, %s38
      %s39 = sphi 0, %s36
      %s40 = sphi 0, %s39
      %s56 = sphi 0, %s40
      %s60 = sphi 0, %s60
      %s62 = sphi 0, %s60
      %s63 = sphi 0, %s62
      %s77 = sphi 0, %s63
      %s81 = sphi 0, %s81
      %s83 = sphi 0, %s81
      %s84 = sphi 0, %s83
      %s98 = sphi 0, %s84
      %s102 = sphi 0, %s102
      %s104 = sphi 0, %s102
      %s105 = sphi 0, %s104
      %s119 = sphi 0, %s105
      %s123 = sphi 0, %s123
      %s125 = sphi 0, %s123
      %s126 = sphi 0, %s125
      %s140 = sphi 0, %s126
      %s144 = sphi 0, %s144
      %s146 = sphi 0, %s144
      %s147 = sphi 0, %s146
      %s161 = sphi 0, %s147
      %s165 = sphi 0, %s165
      %s167 = sphi 0, %s165
      %s168 = sphi 0, %s167
      %s182 = sphi 0, %s168
      %s186 = sphi 0, %s186
      %s188 = sphi 0, %s186
      %s189 = sphi 0, %s188
      %s203 = sphi 0, %s189
      %s207 = sphi 0, %s207
      %s209 = sphi 0, %s207
      %s210 = sphi 0, %s209
      %s224 = sphi 0, %s210
      %s228 = sphi 0, %s228
      %s230 = sphi 0, %s228
      %s231 = sphi 0, %s230
      %s245 = sphi 0, %s231
      %s249 = sphi 0, %s249
      %s251 = sphi 0, %s249
      %s252 = sphi 0, %s251
      %s266 = sphi 0, %s252
      %s270 = sphi 0, %s270
      %s272 = sphi 0, %s270
      %s273 = sphi 0, %s272
      %s287 = sphi 0, %s273
      %s291 = sphi 0, %s291
      %s293 = sphi 0, %s291
      %s294 = sphi 0, %s293
      %s308 = sphi 0, %s294
      %s312 = sphi 0, %s312
      %s314 = sphi 0, %s312
      %s315 = sphi 0, %s314
      %s329 = sphi 0, %s315
      %s333 = sphi 0, %s333
      %s335 = sphi 0, %s333
      %s336 = sphi 0, %s335
      %s350 = sphi 0, %s336
      %s354 = sphi 0, %s354
      %s356 = sphi 0, %s354
      %s357 = sphi 0, %s356
      %s371 = sphi 0, %s357
      %s375 = sphi 0, %s375
      %s377 = sphi 0, %s375
      %s378 = sphi 0, %s377
      %s392 = sphi 0, %s378
      %s396 = sphi 0, %s396
      %s398 = sphi 0, %s396
      %s399 = sphi 0, %s398
      %s413 = sphi 0, %s399
      %s417 = sphi 0, %s417
      %s419 = sphi 0, %s417
      %s420 = sphi 0, %s419
      %s434 = sphi 0, %s420
      %s440 = sphi 0, %s442
      %s443 = sphi 0, %s440
      %s444 = sphi 0, %s443
      %s460 = sphi 0, %s444
    $region4: #{tpu_custom_call.1} parent=1 // loop_header_branch
      %29 = sbr.rel (%p27) target = $region8
    $region5: #{tpu_custom_call.1} parent=1 // loop_body
      %s31 = ssub.s32 %s26, 1
      %s32 = ssub.s32 %s26, 2
      %s33 = sadd.s32 %s26, 1
      %s34 = ssub.s32 %s26, %s33
      %p35 = scmp.eq.s32.totalorder %s34, 0
      %s37 = sadd.s32 %s36, 1
      %s38 = scalar_select %p35, %s36, %s37
      %p41 = pneg %p35
      %p42 = scmp.eq.s32.totalorder %s26, 1
      %p43 = por %p41, %p42
      %p44 = scmp.ne.s32.totalorder %s36, %s39
      %p45 = scmp.eq.s32.totalorder %s26, 0
      %p46 = por %p44, %p45
      %p47 = scmp.ne.s32.totalorder %s36, %s39
      %p48 = scmp.eq.s32.totalorder %s31, 1
      %p49 = por %p47, %p48
      %p50 = scmp.ne.s32.totalorder %s39, %s40
      %p51 = scmp.eq.s32.totalorder %s31, 0
      %p52 = por %p50, %p51
      %p53 = scmp.ne.s32.totalorder %s39, %s40
      %p54 = scmp.eq.s32.totalorder %s32, 1
      %p55 = por %p53, %p54
      %p57 = scmp.ne.s32.totalorder %s40, %s56
      %p58 = scmp.eq.s32.totalorder %s32, 0
      %p59 = por %p57, %p58
      %s61 = sadd.s32 %s60, 1
      %p64 = scmp.eq.s32.totalorder %s26, 1
      %p65 = scmp.ne.s32.totalorder %s60, %s62
      %p66 = scmp.eq.s32.totalorder %s26, 0
      %p67 = por %p65, %p66
      %p68 = scmp.ne.s32.totalorder %s60, %s62
      %p69 = scmp.eq.s32.totalorder %s31, 1
      %p70 = por %p68, %p69
      %p71 = scmp.ne.s32.totalorder %s62, %s63
      %p72 = scmp.eq.s32.totalorder %s31, 0
      %p73 = por %p71, %p72
      %p74 = scmp.ne.s32.totalorder %s62, %s63
      %p75 = scmp.eq.s32.totalorder %s32, 1
      %p76 = por %p74, %p75
      %p78 = scmp.ne.s32.totalorder %s63, %s77
      %p79 = scmp.eq.s32.totalorder %s32, 0
      %p80 = por %p78, %p79
      %s82 = sadd.s32 %s81, 1
      %p85 = scmp.eq.s32.totalorder %s26, 1
      %p86 = scmp.ne.s32.totalorder %s81, %s83
      %p87 = scmp.eq.s32.totalorder %s26, 0
      %p88 = por %p86, %p87
      %p89 = scmp.ne.s32.totalorder %s81, %s83
      %p90 = scmp.eq.s32.totalorder %s31, 1
      %p91 = por %p89, %p90
      %p92 = scmp.ne.s32.totalorder %s83, %s84
      %p93 = scmp.eq.s32.totalorder %s31, 0
      %p94 = por %p92, %p93
      %p95 = scmp.ne.s32.totalorder %s83, %s84
      %p96 = scmp.eq.s32.totalorder %s32, 1
      %p97 = por %p95, %p96
      %p99 = scmp.ne.s32.totalorder %s84, %s98
      %p100 = scmp.eq.s32.totalorder %s32, 0
      %p101 = por %p99, %p100
      %s103 = sadd.s32 %s102, 1
      %p106 = scmp.eq.s32.totalorder %s26, 1
      %p107 = scmp.ne.s32.totalorder %s102, %s104
      %p108 = scmp.eq.s32.totalorder %s26, 0
      %p109 = por %p107, %p108
      %p110 = scmp.ne.s32.totalorder %s102, %s104
      %p111 = scmp.eq.s32.totalorder %s31, 1
      %p112 = por %p110, %p111
      %p113 = scmp.ne.s32.totalorder %s104, %s105
      %p114 = scmp.eq.s32.totalorder %s31, 0
      %p115 = por %p113, %p114
      %p116 = scmp.ne.s32.totalorder %s104, %s105
      %p117 = scmp.eq.s32.totalorder %s32, 1
      %p118 = por %p116, %p117
      %p120 = scmp.ne.s32.totalorder %s105, %s119
      %p121 = scmp.eq.s32.totalorder %s32, 0
      %p122 = por %p120, %p121
      %s124 = sadd.s32 %s123, 1
      %p127 = scmp.eq.s32.totalorder %s26, 1
      %p128 = scmp.ne.s32.totalorder %s123, %s125
      %p129 = scmp.eq.s32.totalorder %s26, 0
      %p130 = por %p128, %p129
      %p131 = scmp.ne.s32.totalorder %s123, %s125
      %p132 = scmp.eq.s32.totalorder %s31, 1
      %p133 = por %p131, %p132
      %p134 = scmp.ne.s32.totalorder %s125, %s126
      %p135 = scmp.eq.s32.totalorder %s31, 0
      %p136 = por %p134, %p135
      %p137 = scmp.ne.s32.totalorder %s125, %s126
      %p138 = scmp.eq.s32.totalorder %s32, 1
      %p139 = por %p137, %p138
      %p141 = scmp.ne.s32.totalorder %s126, %s140
      %p142 = scmp.eq.s32.totalorder %s32, 0
      %p143 = por %p141, %p142
      %s145 = sadd.s32 %s144, 1
      %p148 = scmp.eq.s32.totalorder %s26, 1
      %p149 = scmp.ne.s32.totalorder %s144, %s146
      %p150 = scmp.eq.s32.totalorder %s26, 0
      %p151 = por %p149, %p150
      %p152 = scmp.ne.s32.totalorder %s144, %s146
      %p153 = scmp.eq.s32.totalorder %s31, 1
      %p154 = por %p152, %p153
      %p155 = scmp.ne.s32.totalorder %s146, %s147
      %p156 = scmp.eq.s32.totalorder %s31, 0
      %p157 = por %p155, %p156
      %p158 = scmp.ne.s32.totalorder %s146, %s147
      %p159 = scmp.eq.s32.totalorder %s32, 1
      %p160 = por %p158, %p159
      %p162 = scmp.ne.s32.totalorder %s147, %s161
      %p163 = scmp.eq.s32.totalorder %s32, 0
      %p164 = por %p162, %p163
      %s166 = sadd.s32 %s165, 1
      %p169 = scmp.eq.s32.totalorder %s26, 1
      %p170 = scmp.ne.s32.totalorder %s165, %s167
      %p171 = scmp.eq.s32.totalorder %s26, 0
      %p172 = por %p170, %p171
      %p173 = scmp.ne.s32.totalorder %s165, %s167
      %p174 = scmp.eq.s32.totalorder %s31, 1
      %p175 = por %p173, %p174
      %p176 = scmp.ne.s32.totalorder %s167, %s168
      %p177 = scmp.eq.s32.totalorder %s31, 0
      %p178 = por %p176, %p177
      %p179 = scmp.ne.s32.totalorder %s167, %s168
      %p180 = scmp.eq.s32.totalorder %s32, 1
      %p181 = por %p179, %p180
      %p183 = scmp.ne.s32.totalorder %s168, %s182
      %p184 = scmp.eq.s32.totalorder %s32, 0
      %p185 = por %p183, %p184
      %s187 = sadd.s32 %s186, 1
      %p190 = scmp.eq.s32.totalorder %s26, 1
      %p191 = scmp.ne.s32.totalorder %s186, %s188
      %p192 = scmp.eq.s32.totalorder %s26, 0
      %p193 = por %p191, %p192
      %p194 = scmp.ne.s32.totalorder %s186, %s188
      %p195 = scmp.eq.s32.totalorder %s31, 1
      %p196 = por %p194, %p195
      %p197 = scmp.ne.s32.totalorder %s188, %s189
      %p198 = scmp.eq.s32.totalorder %s31, 0
      %p199 = por %p197, %p198
      %p200 = scmp.ne.s32.totalorder %s188, %s189
      %p201 = scmp.eq.s32.totalorder %s32, 1
      %p202 = por %p200, %p201
      %p204 = scmp.ne.s32.totalorder %s189, %s203
      %p205 = scmp.eq.s32.totalorder %s32, 0
      %p206 = por %p204, %p205
      %s208 = sadd.s32 %s207, 1
      %p211 = scmp.eq.s32.totalorder %s26, 1
      %p212 = scmp.ne.s32.totalorder %s207, %s209
      %p213 = scmp.eq.s32.totalorder %s26, 0
      %p214 = por %p212, %p213
      %p215 = scmp.ne.s32.totalorder %s207, %s209
      %p216 = scmp.eq.s32.totalorder %s31, 1
      %p217 = por %p215, %p216
      %p218 = scmp.ne.s32.totalorder %s209, %s210
      %p219 = scmp.eq.s32.totalorder %s31, 0
      %p220 = por %p218, %p219
      %p221 = scmp.ne.s32.totalorder %s209, %s210
      %p222 = scmp.eq.s32.totalorder %s32, 1
      %p223 = por %p221, %p222
      %p225 = scmp.ne.s32.totalorder %s210, %s224
      %p226 = scmp.eq.s32.totalorder %s32, 0
      %p227 = por %p225, %p226
      %s229 = sadd.s32 %s228, 1
      %p232 = scmp.eq.s32.totalorder %s26, 1
      %p233 = scmp.ne.s32.totalorder %s228, %s230
      %p234 = scmp.eq.s32.totalorder %s26, 0
      %p235 = por %p233, %p234
      %p236 = scmp.ne.s32.totalorder %s228, %s230
      %p237 = scmp.eq.s32.totalorder %s31, 1
      %p238 = por %p236, %p237
      %p239 = scmp.ne.s32.totalorder %s230, %s231
      %p240 = scmp.eq.s32.totalorder %s31, 0
      %p241 = por %p239, %p240
      %p242 = scmp.ne.s32.totalorder %s230, %s231
      %p243 = scmp.eq.s32.totalorder %s32, 1
      %p244 = por %p242, %p243
      %p246 = scmp.ne.s32.totalorder %s231, %s245
      %p247 = scmp.eq.s32.totalorder %s32, 0
      %p248 = por %p246, %p247
      %s250 = sadd.s32 %s249, 1
      %p253 = scmp.eq.s32.totalorder %s26, 1
      %p254 = scmp.ne.s32.totalorder %s249, %s251
      %p255 = scmp.eq.s32.totalorder %s26, 0
      %p256 = por %p254, %p255
      %p257 = scmp.ne.s32.totalorder %s249, %s251
      %p258 = scmp.eq.s32.totalorder %s31, 1
      %p259 = por %p257, %p258
      %p260 = scmp.ne.s32.totalorder %s251, %s252
      %p261 = scmp.eq.s32.totalorder %s31, 0
      %p262 = por %p260, %p261
      %p263 = scmp.ne.s32.totalorder %s251, %s252
      %p264 = scmp.eq.s32.totalorder %s32, 1
      %p265 = por %p263, %p264
      %p267 = scmp.ne.s32.totalorder %s252, %s266
      %p268 = scmp.eq.s32.totalorder %s32, 0
      %p269 = por %p267, %p268
      %s271 = sadd.s32 %s270, 1
      %p274 = scmp.eq.s32.totalorder %s26, 1
      %p275 = scmp.ne.s32.totalorder %s270, %s272
      %p276 = scmp.eq.s32.totalorder %s26, 0
      %p277 = por %p275, %p276
      %p278 = scmp.ne.s32.totalorder %s270, %s272
      %p279 = scmp.eq.s32.totalorder %s31, 1
      %p280 = por %p278, %p279
      %p281 = scmp.ne.s32.totalorder %s272, %s273
      %p282 = scmp.eq.s32.totalorder %s31, 0
      %p283 = por %p281, %p282
      %p284 = scmp.ne.s32.totalorder %s272, %s273
      %p285 = scmp.eq.s32.totalorder %s32, 1
      %p286 = por %p284, %p285
      %p288 = scmp.ne.s32.totalorder %s273, %s287
      %p289 = scmp.eq.s32.totalorder %s32, 0
      %p290 = por %p288, %p289
      %s292 = sadd.s32 %s291, 1
      %p295 = scmp.eq.s32.totalorder %s26, 1
      %p296 = scmp.ne.s32.totalorder %s291, %s293
      %p297 = scmp.eq.s32.totalorder %s26, 0
      %p298 = por %p296, %p297
      %p299 = scmp.ne.s32.totalorder %s291, %s293
      %p300 = scmp.eq.s32.totalorder %s31, 1
      %p301 = por %p299, %p300
      %p302 = scmp.ne.s32.totalorder %s293, %s294
      %p303 = scmp.eq.s32.totalorder %s31, 0
      %p304 = por %p302, %p303
      %p305 = scmp.ne.s32.totalorder %s293, %s294
      %p306 = scmp.eq.s32.totalorder %s32, 1
      %p307 = por %p305, %p306
      %p309 = scmp.ne.s32.totalorder %s294, %s308
      %p310 = scmp.eq.s32.totalorder %s32, 0
      %p311 = por %p309, %p310
      %s313 = sadd.s32 %s312, 1
      %p316 = scmp.eq.s32.totalorder %s26, 1
      %p317 = scmp.ne.s32.totalorder %s312, %s314
      %p318 = scmp.eq.s32.totalorder %s26, 0
      %p319 = por %p317, %p318
      %p320 = scmp.ne.s32.totalorder %s312, %s314
      %p321 = scmp.eq.s32.totalorder %s31, 1
      %p322 = por %p320, %p321
      %p323 = scmp.ne.s32.totalorder %s314, %s315
      %p324 = scmp.eq.s32.totalorder %s31, 0
      %p325 = por %p323, %p324
      %p326 = scmp.ne.s32.totalorder %s314, %s315
      %p327 = scmp.eq.s32.totalorder %s32, 1
      %p328 = por %p326, %p327
      %p330 = scmp.ne.s32.totalorder %s315, %s329
      %p331 = scmp.eq.s32.totalorder %s32, 0
      %p332 = por %p330, %p331
      %s334 = sadd.s32 %s333, 1
      %p337 = scmp.eq.s32.totalorder %s26, 1
      %p338 = scmp.ne.s32.totalorder %s333, %s335
      %p339 = scmp.eq.s32.totalorder %s26, 0
      %p340 = por %p338, %p339
      %p341 = scmp.ne.s32.totalorder %s333, %s335
      %p342 = scmp.eq.s32.totalorder %s31, 1
      %p343 = por %p341, %p342
      %p344 = scmp.ne.s32.totalorder %s335, %s336
      %p345 = scmp.eq.s32.totalorder %s31, 0
      %p346 = por %p344, %p345
      %p347 = scmp.ne.s32.totalorder %s335, %s336
      %p348 = scmp.eq.s32.totalorder %s32, 1
      %p349 = por %p347, %p348
      %p351 = scmp.ne.s32.totalorder %s336, %s350
      %p352 = scmp.eq.s32.totalorder %s32, 0
      %p353 = por %p351, %p352
      %s355 = sadd.s32 %s354, 1
      %p358 = scmp.eq.s32.totalorder %s26, 1
      %p359 = scmp.ne.s32.totalorder %s354, %s356
      %p360 = scmp.eq.s32.totalorder %s26, 0
      %p361 = por %p359, %p360
      %p362 = scmp.ne.s32.totalorder %s354, %s356
      %p363 = scmp.eq.s32.totalorder %s31, 1
      %p364 = por %p362, %p363
      %p365 = scmp.ne.s32.totalorder %s356, %s357
      %p366 = scmp.eq.s32.totalorder %s31, 0
      %p367 = por %p365, %p366
      %p368 = scmp.ne.s32.totalorder %s356, %s357
      %p369 = scmp.eq.s32.totalorder %s32, 1
      %p370 = por %p368, %p369
      %p372 = scmp.ne.s32.totalorder %s357, %s371
      %p373 = scmp.eq.s32.totalorder %s32, 0
      %p374 = por %p372, %p373
      %s376 = sadd.s32 %s375, 1
      %p379 = scmp.eq.s32.totalorder %s26, 1
      %p380 = scmp.ne.s32.totalorder %s375, %s377
      %p381 = scmp.eq.s32.totalorder %s26, 0
      %p382 = por %p380, %p381
      %p383 = scmp.ne.s32.totalorder %s375, %s377
      %p384 = scmp.eq.s32.totalorder %s31, 1
      %p385 = por %p383, %p384
      %p386 = scmp.ne.s32.totalorder %s377, %s378
      %p387 = scmp.eq.s32.totalorder %s31, 0
      %p388 = por %p386, %p387
      %p389 = scmp.ne.s32.totalorder %s377, %s378
      %p390 = scmp.eq.s32.totalorder %s32, 1
      %p391 = por %p389, %p390
      %p393 = scmp.ne.s32.totalorder %s378, %s392
      %p394 = scmp.eq.s32.totalorder %s32, 0
      %p395 = por %p393, %p394
      %s397 = sadd.s32 %s396, 1
      %p400 = scmp.eq.s32.totalorder %s26, 1
      %p401 = scmp.ne.s32.totalorder %s396, %s398
      %p402 = scmp.eq.s32.totalorder %s26, 0
      %p403 = por %p401, %p402
      %p404 = scmp.ne.s32.totalorder %s396, %s398
      %p405 = scmp.eq.s32.totalorder %s31, 1
      %p406 = por %p404, %p405
      %p407 = scmp.ne.s32.totalorder %s398, %s399
      %p408 = scmp.eq.s32.totalorder %s31, 0
      %p409 = por %p407, %p408
      %p410 = scmp.ne.s32.totalorder %s398, %s399
      %p411 = scmp.eq.s32.totalorder %s32, 1
      %p412 = por %p410, %p411
      %p414 = scmp.ne.s32.totalorder %s399, %s413
      %p415 = scmp.eq.s32.totalorder %s32, 0
      %p416 = por %p414, %p415
      %s418 = sadd.s32 %s417, 1
      %p421 = scmp.eq.s32.totalorder %s26, 1
      %p422 = scmp.ne.s32.totalorder %s417, %s419
      %p423 = scmp.eq.s32.totalorder %s26, 0
      %p424 = por %p422, %p423
      %p425 = scmp.ne.s32.totalorder %s417, %s419
      %p426 = scmp.eq.s32.totalorder %s31, 1
      %p427 = por %p425, %p426
      %p428 = scmp.ne.s32.totalorder %s419, %s420
      %p429 = scmp.eq.s32.totalorder %s31, 0
      %p430 = por %p428, %p429
      %p431 = scmp.ne.s32.totalorder %s419, %s420
      %p432 = scmp.eq.s32.totalorder %s32, 1
      %p433 = por %p431, %p432
      %p435 = scmp.ne.s32.totalorder %s420, %s434
      %p436 = scmp.eq.s32.totalorder %s32, 0
      %p437 = por %p435, %p436
      %s438 = ssub.s32 %s26, %s33
      %p439 = scmp.eq.s32.totalorder %s438, 0
      %s441 = sadd.s32 %s440, 1
      %s442 = scalar_select %p439, %s440, %s441
      %p445 = pneg %p439
      %p446 = scmp.eq.s32.totalorder %s26, 1
      %p447 = por %p445, %p446
      %p448 = scmp.ne.s32.totalorder %s440, %s443
      %p449 = scmp.eq.s32.totalorder %s26, 0
      %p450 = por %p448, %p449
      %p451 = scmp.ne.s32.totalorder %s440, %s443
      %p452 = scmp.eq.s32.totalorder %s31, 1
      %p453 = por %p451, %p452
      %p454 = scmp.ne.s32.totalorder %s443, %s444
      %p455 = scmp.eq.s32.totalorder %s31, 0
      %p456 = por %p454, %p455
      %p457 = scmp.ne.s32.totalorder %s443, %s444
      %p458 = scmp.eq.s32.totalorder %s32, 1
      %p459 = por %p457, %p458
      %p461 = scmp.ne.s32.totalorder %s444, %s460
      %p462 = scmp.eq.s32.totalorder %s32, 0
      %p463 = por %p461, %p462
      %p464 = scmp.le.s32.totalorder 1, %s26
      %p465 = scmp.lt.s32.totalorder %s26, 3
      %p466 = pnand %p464, %p465
      %p467 = pneg %p466
      // Predicated region
      $region9: #{tpu_custom_call.1} parent=5 // pred_check
        _
      $region10: #{tpu_custom_call.1} parent=5 // pred_check_branch
        %469 = sbr.rel (%p466) target = $region12
      $region11: #{tpu_custom_call.1} parent=5 // pred_region
        %s470 = ssub.s32 %s26, 1
        // Predicated region
        $region13: #{tpu_custom_call.1} parent=11 // pred_check
          %p471 = pneg %p73
        $region14: #{tpu_custom_call.1} parent=11 // pred_check_branch
          %473 = sbr.rel (%p471) target = $region16
        $region15: #{tpu_custom_call.1} parent=11 // pred_region
          _
        $region16: #{tpu_custom_call.1} parent=11 // pred_fallthru
          _
        // Predicated region
        $region17: #{tpu_custom_call.1} parent=11 // pred_check
          %p474 = pneg %p94
        $region18: #{tpu_custom_call.1} parent=11 // pred_check_branch
          %476 = sbr.rel (%p474) target = $region20
        $region19: #{tpu_custom_call.1} parent=11 // pred_region
          _
        $region20: #{tpu_custom_call.1} parent=11 // pred_fallthru
          _
        // Predicated region
        $region21: #{tpu_custom_call.1} parent=11 // pred_check
          %p477 = pneg %p115
        $region22: #{tpu_custom_call.1} parent=11 // pred_check_branch
          %479 = sbr.rel (%p477) target = $region24
        $region23: #{tpu_custom_call.1} parent=11 // pred_region
          _
        $region24: #{tpu_custom_call.1} parent=11 // pred_fallthru
          _
        // Predicated region
        $region25: #{tpu_custom_call.1} parent=11 // pred_check
          %p480 = pneg %p136
        $region26: #{tpu_custom_call.1} parent=11 // pred_check_branch
          %482 = sbr.rel (%p480) target = $region28
        $region27: #{tpu_custom_call.1} parent=11 // pred_region
          _
        $region28: #{tpu_custom_call.1} parent=11 // pred_fallthru
          _
        // Predicated region
        $region29: #{tpu_custom_call.1} parent=11 // pred_check
          %p483 = pneg %p157
        $region30: #{tpu_custom_call.1} parent=11 // pred_check_branch
          %485 = sbr.rel (%p483) target = $region32
        $region31: #{tpu_custom_call.1} parent=11 // pred_region
          _
        $region32: #{tpu_custom_call.1} parent=11 // pred_fallthru
          _
        // Predicated region
        $region33: #{tpu_custom_call.1} parent=11 // pred_check
          %p486 = pneg %p178
        $region34: #{tpu_custom_call.1} parent=11 // pred_check_branch
          %488 = sbr.rel (%p486) target = $region36
        $region35: #{tpu_custom_call.1} parent=11 // pred_region
          _
        $region36: #{tpu_custom_call.1} parent=11 // pred_fallthru
          _
        // Predicated region
        $region37: #{tpu_custom_call.1} parent=11 // pred_check
          %p489 = pneg %p199
        $region38: #{tpu_custom_call.1} parent=11 // pred_check_branch
          %491 = sbr.rel (%p489) target = $region40
        $region39: #{tpu_custom_call.1} parent=11 // pred_region
          _
        $region40: #{tpu_custom_call.1} parent=11 // pred_fallthru
          _
        // Predicated region
        $region41: #{tpu_custom_call.1} parent=11 // pred_check
          %p492 = pneg %p220
        $region42: #{tpu_custom_call.1} parent=11 // pred_check_branch
          %494 = sbr.rel (%p492) target = $region44
        $region43: #{tpu_custom_call.1} parent=11 // pred_region
          _
        $region44: #{tpu_custom_call.1} parent=11 // pred_fallthru
          _
        // Predicated region
        $region45: #{tpu_custom_call.1} parent=11 // pred_check
          %p495 = pneg %p241
        $region46: #{tpu_custom_call.1} parent=11 // pred_check_branch
          %497 = sbr.rel (%p495) target = $region48
        $region47: #{tpu_custom_call.1} parent=11 // pred_region
          %499 = vsyncadd [#allocation3], 0
          %s501 = sshll.u32 %s9, 4
          %s502 = int_to_ptr.hbm [resolvable:$true] %s501
          %s503 = sshll.u32 [#allocation2], 4
          %s504 = int_to_ptr.vmem [resolvable:$true] %s503
          %506 = dma.hbm_to_vmem [thread:$0]  %s502, 128, %s504, [#allocation3]
        $region48: #{tpu_custom_call.1} parent=11 // pred_fallthru
          _
        // Predicated region
        $region49: #{tpu_custom_call.1} parent=11 // pred_check
          %p507 = pneg %p262
        $region50: #{tpu_custom_call.1} parent=11 // pred_check_branch
          %509 = sbr.rel (%p507) target = $region52
        $region51: #{tpu_custom_call.1} parent=11 // pred_region
          _
        $region52: #{tpu_custom_call.1} parent=11 // pred_fallthru
          _
        // Predicated region
        $region53: #{tpu_custom_call.1} parent=11 // pred_check
          %p510 = pneg %p283
        $region54: #{tpu_custom_call.1} parent=11 // pred_check_branch
          %512 = sbr.rel (%p510) target = $region56
        $region55: #{tpu_custom_call.1} parent=11 // pred_region
          _
        $region56: #{tpu_custom_call.1} parent=11 // pred_fallthru
          _
        // Predicated region
        $region57: #{tpu_custom_call.1} parent=11 // pred_check
          %p513 = pneg %p304
        $region58: #{tpu_custom_call.1} parent=11 // pred_check_branch
          %515 = sbr.rel (%p513) target = $region60
        $region59: #{tpu_custom_call.1} parent=11 // pred_region
          _
        $region60: #{tpu_custom_call.1} parent=11 // pred_fallthru
          _
        // Predicated region
        $region61: #{tpu_custom_call.1} parent=11 // pred_check
          %p516 = pneg %p325
        $region62: #{tpu_custom_call.1} parent=11 // pred_check_branch
          %518 = sbr.rel (%p516) target = $region64
        $region63: #{tpu_custom_call.1} parent=11 // pred_region
          _
        $region64: #{tpu_custom_call.1} parent=11 // pred_fallthru
          _
        // Predicated region
        $region65: #{tpu_custom_call.1} parent=11 // pred_check
          %p519 = pneg %p346
        $region66: #{tpu_custom_call.1} parent=11 // pred_check_branch
          %521 = sbr.rel (%p519) target = $region68
        $region67: #{tpu_custom_call.1} parent=11 // pred_region
          _
        $region68: #{tpu_custom_call.1} parent=11 // pred_fallthru
          _
        // Predicated region
        $region69: #{tpu_custom_call.1} parent=11 // pred_check
          %p522 = pneg %p367
        $region70: #{tpu_custom_call.1} parent=11 // pred_check_branch
          %524 = sbr.rel (%p522) target = $region72
        $region71: #{tpu_custom_call.1} parent=11 // pred_region
          _
        $region72: #{tpu_custom_call.1} parent=11 // pred_fallthru
          _
        // Predicated region
        $region73: #{tpu_custom_call.1} parent=11 // pred_check
          %p525 = pneg %p388
        $region74: #{tpu_custom_call.1} parent=11 // pred_check_branch
          %527 = sbr.rel (%p525) target = $region76
        $region75: #{tpu_custom_call.1} parent=11 // pred_region
          _
        $region76: #{tpu_custom_call.1} parent=11 // pred_fallthru
          _
        // Predicated region
        $region77: #{tpu_custom_call.1} parent=11 // pred_check
          %p528 = pneg %p409
        $region78: #{tpu_custom_call.1} parent=11 // pred_check_branch
          %530 = sbr.rel (%p528) target = $region80
        $region79: #{tpu_custom_call.1} parent=11 // pred_region
          _
        $region80: #{tpu_custom_call.1} parent=11 // pred_fallthru
          _
        // Predicated region
        $region81: #{tpu_custom_call.1} parent=11 // pred_check
          %p531 = pneg %p430
        $region82: #{tpu_custom_call.1} parent=11 // pred_check_branch
          %533 = sbr.rel (%p531) target = $region84
        $region83: #{tpu_custom_call.1} parent=11 // pred_region
          _
        $region84: #{tpu_custom_call.1} parent=11 // pred_fallthru
          _
      $region12: #{tpu_custom_call.1} parent=5 // pred_fallthru
        _
      %p534 = scmp.lt.s32.totalorder %s26, 2
      // Predicated region
      $region85: #{tpu_custom_call.1} parent=5 // pred_check
        %p535 = pneg %p534
      $region86: #{tpu_custom_call.1} parent=5 // pred_check_branch
        %537 = sbr.rel (%p535) target = $region88
      $region87: #{tpu_custom_call.1} parent=5 // pred_region
        // Predicated region
        $region89: #{tpu_custom_call.1} parent=87 // pred_check
          %p538 = pneg %p46
        $region90: #{tpu_custom_call.1} parent=87 // pred_check_branch
          %540 = sbr.rel (%p538) target = $region92
        $region91: #{tpu_custom_call.1} parent=87 // pred_region
          %p541 = scmp.lt.s32.totalorder %s26, 1
          %s542 = scalar_select %p541, %s26, 1
          %s543 = smul.addr %s542, 4
          %s544 = scalar_lea.vmem %s0, %s543
        $region92: #{tpu_custom_call.1} parent=87 // pred_fallthru
          _
      $region88: #{tpu_custom_call.1} parent=5 // pred_fallthru
        _
      %p545 = scmp.le.s32.totalorder 1, %s26
      %p546 = scmp.lt.s32.totalorder %s26, 3
      %p547 = pnand %p545, %p546
      %p548 = pneg %p547
      // Predicated region
      $region93: #{tpu_custom_call.1} parent=5 // pred_check
        _
      $region94: #{tpu_custom_call.1} parent=5 // pred_check_branch
        %550 = sbr.rel (%p547) target = $region96
      $region95: #{tpu_custom_call.1} parent=5 // pred_region
        %s551 = ssub.s32 %s26, 1
        // Predicated region
        $region97: #{tpu_custom_call.1} parent=95 // pred_check
          %p552 = pneg %p241
        $region98: #{tpu_custom_call.1} parent=95 // pred_check_branch
          %554 = sbr.rel (%p552) target = $region100
        $region99: #{tpu_custom_call.1} parent=95 // pred_region
          %556 = dma.done [#allocation3], 128
        $region100: #{tpu_custom_call.1} parent=95 // pred_fallthru
          _
        %p557 = scmp.lt.s32.totalorder %s31, 1
        %s558 = scalar_select %p557, %s31, 1
        %s559 = smul.addr %s558, 4
        %s560 = scalar_lea.vmem %s0, %s559
        %p561 = pneg %p52
        %p562 = pneg %p49
        %p563 = pneg %p73
        %p564 = pneg %p70
        %p565 = pneg %p94
        %p566 = pneg %p91
        %p567 = pneg %p115
        %p568 = pneg %p112
        %p569 = pneg %p136
        %p570 = pneg %p133
        %p571 = pneg %p157
        %p572 = pneg %p154
        %p573 = pneg %p178
        %p574 = pneg %p175
        %p575 = pneg %p199
        %p576 = pneg %p196
        %p577 = pneg %p220
        %p578 = pneg %p217
        %p579 = pneg %p241
        %p580 = pneg %p238
        %p581 = pneg %p262
        %p582 = pneg %p259
        %p583 = pneg %p283
        %p584 = pneg %p280
        %p585 = pneg %p304
        %p586 = pneg %p301
        %p587 = pneg %p325
        %p588 = pneg %p322
        %p589 = pneg %p346
        %p590 = pneg %p343
        %p591 = pneg %p367
        %p592 = pneg %p364
        %p593 = pneg %p388
        %p594 = pneg %p385
        %p595 = pneg %p409
        %p596 = pneg %p406
        %p597 = pneg %p430
        %p598 = pneg %p427
        %p599 = pneg %p456
        %p600 = pneg %p453
        %p601 = scmp.lt.s32.totalorder %s31, 1
        %s602 = scalar_select %p601, %s31, 1
        %s603 = smul.addr %s602, 2
        %s604 = smul.addr %s603, 8
        %s605 = scalar_lea.vmem %s19, %s604
        %p606 = scmp.lt.s32.totalorder %s31, 1
        %s607 = scalar_select %p606, %s31, 1
        %s608 = smul.addr %s607, 4
        %s609 = scalar_lea.vmem %s0, %s608
        %p610 = scmp.lt.s32.totalorder %s31, 1
        %s611 = scalar_select %p610, %s31, 1
        %s612 = smul.addr %s611, 2
        %s613 = smul.addr %s612, 8
        %s614 = scalar_lea.vmem %s19, %s613
        %v615 = vld [vmem:[%s609] sm:$0xf]
        %v616 = vld [vmem:[%s1] sm:$0xf]
        %v617 = vld [vmem:[%s2] sm:$0xf]
        %v618 = vld [vmem:[%s3] sm:$0xf]
        %v619 = vld [vmem:[%s4] sm:$0xf]
        %621 = vrot.lane.b32.xlu0 %v615, 1
        %v622 = vpop.permute.xlu0 %621
        %vm624 = vcmask 7168
        %v625 = vsel %vm624, 0.0, %v622
        %vm626 = vcmask 138240
        %v627 = vsel %vm626, %v625, 0.0
        %v629 = vrot.slane %v627, 4
        %630 = vrot.lane.b32.xlu0 %v629, 127
        %v631 = vpop.permute.xlu0 %630
        %633 = vrot.lane.b32.xlu0 %v627, 126
        %v634 = vpop.permute.xlu0 %633
        %vm635 = vcmask 1043456
        %v636 = vsel %vm635, %v627, %v631
        %638 = vset.pattern.permute.xlu0 0
        %639 = vperm.xlu0 %638, %v617
        %v640 = vpop.permute.xlu0 %639
        %vm642 = vcmask 97280
        %v644 = vsel %vm642, %v616, 0
        %v646 = vsel %vm635, %v634, 0
        %648 = vmatpush.msra.mxu0 0.0
        %649 = vmatpush.msra.mxu0 0.0
        %650 = vmatpush.msra.mxu0 0.0
        %651 = vmatpush.msra.mxu0 0.0
        %652 = vmatpush.msra.mxu0 0.0
        %653 = vmatpush.msra.mxu0 0.0
        %654 = vmatpush.msra.mxu0 0.0
        %655 = vmatpush.msra.mxu0 0.0
        %656 = vmatpush.msra.mxu0 0.0
        %657 = vmatpush.msra.mxu0 0.0
        %658 = vmatpush.msra.mxu0 0.0
        %659 = vmatpush.msra.mxu0 0.0
        %660 = vmatpush.msra.mxu0 0.0
        %661 = vmatpush.msra.mxu0 0.0
        %662 = vmatpush.msra.mxu0 %v646
        %663 = vmatpush.msra.mxu0 %v636
        %664 = vmatmul.f32.gmra.mxu0 %v644
        %v665 = vpop.f32.mrf.mxu0
        %v666 = vadd.f32 %v640, %v665
        %667 = vdwg.mxu0
        %v668 = vmax.f32 %v666, 0.0
        %670 = vrot.lane.b32.xlu0 %v668, 1
        %v671 = vpop.permute.xlu0 %670
        %v673 = vsel %vm624, 0.0, %v671
        %v674 = vsel %vm626, %v673, 0.0
        %v676 = vrot.slane %v674, 4
        %677 = vrot.lane.b32.xlu0 %v676, 127
        %v678 = vpop.permute.xlu0 %677
        %680 = vrot.lane.b32.xlu0 %v674, 126
        %v681 = vpop.permute.xlu0 %680
        %v682 = vsel %vm635, %v674, %v678
        %684 = vset.pattern.permute.xlu0 0
        %685 = vperm.xlu0 %684, %v619
        %v686 = vpop.permute.xlu0 %685
        %v689 = vsel %vm642, %v618, 0
        %v691 = vsel %vm635, %v681, 0
        %693 = vmatpush.msra.mxu0 0.0
        %694 = vmatpush.msra.mxu0 0.0
        %695 = vmatpush.msra.mxu0 0.0
        %696 = vmatpush.msra.mxu0 0.0
        %697 = vmatpush.msra.mxu0 0.0
        %698 = vmatpush.msra.mxu0 0.0
        %699 = vmatpush.msra.mxu0 0.0
        %700 = vmatpush.msra.mxu0 0.0
        %701 = vmatpush.msra.mxu0 0.0
        %702 = vmatpush.msra.mxu0 0.0
        %703 = vmatpush.msra.mxu0 0.0
        %704 = vmatpush.msra.mxu0 0.0
        %705 = vmatpush.msra.mxu0 0.0
        %706 = vmatpush.msra.mxu0 0.0
        %707 = vmatpush.msra.mxu0 %v691
        %708 = vmatpush.msra.mxu0 %v682
        %709 = vmatmul.f32.gmra.mxu0 %v689
        %v710 = vpop.f32.mrf.mxu0
        %v711 = vadd.f32 %v686, %v710
        %712 = vdwg.mxu0
        %v713 = vmax.f32 %v711, 0.0
        %v715 = vrot.slane %v713, 4
        %v717 = vsel %vm635, %v615, %v715
        %v718 = vld [vmem:[%s5] sm:$0xf]
        %v719 = vld [vmem:[%s6] sm:$0xf]
        %v720 = vld [vmem:[%s7] sm:$0xf]
        %v721 = vld [vmem:[%s8] sm:$0xf]
        %723 = vrot.lane.b32.xlu0 %v717, 1
        %v724 = vpop.permute.xlu0 %723
        %v726 = vsel %vm624, 0.0, %v724
        %v727 = vsel %vm626, %v726, 0.0
        %729 = vrot.lane.b32.xlu0 %v727, 127
        %v730 = vpop.permute.xlu0 %729
        %732 = vrot.lane.b32.xlu0 %v727, 126
        %v733 = vpop.permute.xlu0 %732
        %736 = vset.pattern.permute.xlu0 0
        %737 = vperm.xlu0 %736, %v719
        %v738 = vpop.permute.xlu0 %737
        %vm740 = vcmask 195584
        %v742 = vsel %vm740, %v718, 0
        %744 = vmatpush.msra.mxu0 0.0
        %745 = vmatpush.msra.mxu0 0.0
        %746 = vmatpush.msra.mxu0 0.0
        %747 = vmatpush.msra.mxu0 0.0
        %748 = vmatpush.msra.mxu0 0.0
        %749 = vmatpush.msra.mxu0 0.0
        %750 = vmatpush.msra.mxu0 0.0
        %751 = vmatpush.msra.mxu0 0.0
        %752 = vmatpush.msra.mxu0 0.0
        %753 = vmatpush.msra.mxu0 0.0
        %754 = vmatpush.msra.mxu0 0.0
        %755 = vmatpush.msra.mxu0 0.0
        %756 = vmatpush.msra.mxu0 0.0
        %757 = vmatpush.msra.mxu0 %v733
        %758 = vmatpush.msra.mxu0 %v730
        %759 = vmatpush.msra.mxu0 %v727
        %760 = vmatmul.f32.gmra.mxu0 %v742
        %v761 = vpop.f32.mrf.mxu0
        %v762 = vadd.f32 %v738, %v761
        %763 = vdwg.mxu0
        %v764 = vmax.f32 %v762, 0.0
        %766 = vrot.lane.b32.xlu0 %v764, 1
        %v767 = vpop.permute.xlu0 %766
        %v769 = vsel %vm624, 0.0, %v767
        %v770 = vsel %vm626, %v769, 0.0
        %v772 = vrot.slane %v770, 4
        %773 = vrot.lane.b32.xlu0 %v772, 127
        %v774 = vpop.permute.xlu0 %773
        %776 = vrot.lane.b32.xlu0 %v770, 126
        %v777 = vpop.permute.xlu0 %776
        %v778 = vsel %vm635, %v770, %v774
        %780 = vset.pattern.permute.xlu0 0
        %781 = vperm.xlu0 %780, %v721
        %v782 = vpop.permute.xlu0 %781
        %v785 = vsel %vm642, %v720, 0
        %v787 = vsel %vm635, %v777, 0
        %789 = vmatpush.msra.mxu0 0.0
        %790 = vmatpush.msra.mxu0 0.0
        %791 = vmatpush.msra.mxu0 0.0
        %792 = vmatpush.msra.mxu0 0.0
        %793 = vmatpush.msra.mxu0 0.0
        %794 = vmatpush.msra.mxu0 0.0
        %795 = vmatpush.msra.mxu0 0.0
        %796 = vmatpush.msra.mxu0 0.0
        %797 = vmatpush.msra.mxu0 0.0
        %798 = vmatpush.msra.mxu0 0.0
        %799 = vmatpush.msra.mxu0 0.0
        %800 = vmatpush.msra.mxu0 0.0
        %801 = vmatpush.msra.mxu0 0.0
        %802 = vmatpush.msra.mxu0 0.0
        %803 = vmatpush.msra.mxu0 %v787
        %804 = vmatpush.msra.mxu0 %v778
        %805 = vmatmul.f32.gmra.mxu0 %v785
        %v806 = vpop.f32.mrf.mxu0
        %v807 = vadd.f32 %v782, %v806
        %808 = vdwg.mxu0
        %v809 = vmax.f32 %v807, 0.0
        %v810 = vld [vmem:[#allocation2] sm:$0x3f]
        %v811 = vld [vmem:[%s10] sm:$0x3f]
        %813 = vset.pattern.permute.xlu0 0
        %814 = vperm.xlu0 %813, %v811
        %v815 = vpop.permute.xlu0 %814
        %v818 = vsel %vm642, %v810, 0
        %v821 = vsel %vm635, %v809, 0
        %823 = vmatpush.msra.mxu0 0.0
        %824 = vmatpush.msra.mxu0 0.0
        %825 = vmatpush.msra.mxu0 0.0
        %826 = vmatpush.msra.mxu0 0.0
        %827 = vmatpush.msra.mxu0 0.0
        %828 = vmatpush.msra.mxu0 0.0
        %829 = vmatpush.msra.mxu0 0.0
        %830 = vmatpush.msra.mxu0 0.0
        %831 = vmatpush.msra.mxu0 0.0
        %832 = vmatpush.msra.mxu0 0.0
        %833 = vmatpush.msra.mxu0 0.0
        %834 = vmatpush.msra.mxu0 0.0
        %835 = vmatpush.msra.mxu0 0.0
        %836 = vmatpush.msra.mxu0 0.0
        %837 = vmatpush.msra.mxu0 %v821
        %838 = vmatpush.msra.mxu0 %v717
        %839 = vmatmul.f32.gmra.mxu0 %v818
        %v840 = vpop.f32.mrf.mxu0
        %v841 = vadd.f32 %v815, %v840
        %842 = vdwg.mxu0
        %v843 = vmax.f32 %v841, 0.0
        %v844 = vlaneseq
        %v845 = vshrl.u32 %v844, 7
        %v846 = vadd.s32 %v845, 8
        %v847 = vlaneseq
        %v848 = vand.u32 %v847, 127
        %v849 = vmul.u32 %v848, 2
        %vm850 = vcmp.ge.s32.totalorder %v845, %v849
        %vm851 = vcmp.ge.s32.totalorder %v846, %v849
        %v852 = vadd.s32 %v848, 1
        %v853 = vmul.u32 %v852, 2
        %vm854 = vcmp.lt.s32.totalorder %v845, %v853
        %vm855 = vcmp.lt.s32.totalorder %v846, %v853
        %vm856 = vmand %vm850, %vm854
        %vm857 = vmand %vm851, %vm855
        %v858 = vsel %vm856, 0.5, 0.0
        %v859 = vsel %vm857, 0.5, 0.0
        %vm860 = vcmask 130048
        %v862 = vsel %vm860, %v843, 0
        %864 = vmatpush.msra.mxu0 0.0
        %865 = vmatpush.msra.mxu0 0.0
        %866 = vmatpush.msra.mxu0 0.0
        %867 = vmatpush.msra.mxu0 0.0
        %868 = vmatpush.msra.mxu0 0.0
        %869 = vmatpush.msra.mxu0 0.0
        %870 = vmatpush.msra.mxu0 0.0
        %871 = vmatpush.msra.mxu0 0.0
        %872 = vmatpush.msra.mxu0 0.0
        %873 = vmatpush.msra.mxu0 0.0
        %874 = vmatpush.msra.mxu0 0.0
        %875 = vmatpush.msra.mxu0 0.0
        %876 = vmatpush.msra.mxu0 0.0
        %877 = vmatpush.msra.mxu0 0.0
        %878 = vmatpush.msra.mxu0 %v859
        %879 = vmatpush.msra.mxu0 %v858
        %880 = vmatmul.f32.gmra.mxu0 %v862
        %v881 = vpop.f32.mrf.mxu0
        %v882 = vadd.f32 0.0, %v881
        %883 = vdwg.mxu0
        %v884 = vld [vmem:[%s11] sm:$0xf]
        %v885 = vld [vmem:[%s12] sm:$0xf]
        %v886 = vld [vmem:[%s13] sm:$0xf]
        %v887 = vld [vmem:[%s14] sm:$0xf]
        %889 = vrot.lane.b32.xlu0 %v882, 1
        %v890 = vpop.permute.xlu0 %889
        %v892 = vsel %vm624, 0.0, %v890
        %vm893 = vcmask 72704
        %v894 = vsel %vm893, %v892, 0.0
        %v896 = vrot.slane %v894, 2
        %897 = vrot.lane.b32.xlu0 %v896, 127
        %v898 = vpop.permute.xlu0 %897
        %v900 = vrot.slane %v894, 4
        %901 = vrot.lane.b32.xlu0 %v900, 126
        %v902 = vpop.permute.xlu0 %901
        %vm904 = vcmask 1045504
        %v905 = vsel %vm904, %v894, %v898
        %v906 = vsel %vm635, %v898, %v902
        %908 = vset.pattern.permute.xlu0 0
        %909 = vperm.xlu0 %908, %v885
        %v910 = vpop.permute.xlu0 %909
        %vm912 = vcmask 146432
        %v914 = vsel %vm912, %v884, 0
        %vm916 = vcmask 1041408
        %v917 = vsel %vm916, %v902, 0
        %919 = vmatpush.msra.mxu0 0.0
        %920 = vmatpush.msra.mxu0 0.0
        %921 = vmatpush.msra.mxu0 0.0
        %922 = vmatpush.msra.mxu0 0.0
        %923 = vmatpush.msra.mxu0 0.0
        %924 = vmatpush.msra.mxu0 0.0
        %925 = vmatpush.msra.mxu0 0.0
        %926 = vmatpush.msra.mxu0 0.0
        %927 = vmatpush.msra.mxu0 0.0
        %928 = vmatpush.msra.mxu0 0.0
        %929 = vmatpush.msra.mxu0 0.0
        %930 = vmatpush.msra.mxu0 0.0
        %931 = vmatpush.msra.mxu0 0.0
        %932 = vmatpush.msra.mxu0 %v917
        %933 = vmatpush.msra.mxu0 %v906
        %934 = vmatpush.msra.mxu0 %v905
        %935 = vmatmul.f32.gmra.mxu0 %v914
        %v936 = vpop.f32.mrf.mxu0
        %v937 = vadd.f32 %v910, %v936
        %938 = vdwg.mxu0
        %v939 = vmax.f32 %v937, 0.0
        %941 = vrot.lane.b32.xlu0 %v939, 1
        %v942 = vpop.permute.xlu0 %941
        %v944 = vsel %vm624, 0.0, %v942
        %v945 = vsel %vm893, %v944, 0.0
        %v947 = vrot.slane %v945, 4
        %948 = vrot.lane.b32.xlu0 %v947, 127
        %v949 = vpop.permute.xlu0 %948
        %951 = vrot.lane.b32.xlu0 %v945, 126
        %v952 = vpop.permute.xlu0 %951
        %v953 = vsel %vm635, %v945, %v949
        %955 = vset.pattern.permute.xlu0 0
        %956 = vperm.xlu0 %955, %v887
        %v957 = vpop.permute.xlu0 %956
        %v960 = vsel %vm642, %v886, 0
        %v962 = vsel %vm635, %v952, 0
        %964 = vmatpush.msra.mxu0 0.0
        %965 = vmatpush.msra.mxu0 0.0
        %966 = vmatpush.msra.mxu0 0.0
        %967 = vmatpush.msra.mxu0 0.0
        %968 = vmatpush.msra.mxu0 0.0
        %969 = vmatpush.msra.mxu0 0.0
        %970 = vmatpush.msra.mxu0 0.0
        %971 = vmatpush.msra.mxu0 0.0
        %972 = vmatpush.msra.mxu0 0.0
        %973 = vmatpush.msra.mxu0 0.0
        %974 = vmatpush.msra.mxu0 0.0
        %975 = vmatpush.msra.mxu0 0.0
        %976 = vmatpush.msra.mxu0 0.0
        %977 = vmatpush.msra.mxu0 0.0
        %978 = vmatpush.msra.mxu0 %v962
        %979 = vmatpush.msra.mxu0 %v953
        %980 = vmatmul.f32.gmra.mxu0 %v960
        %v981 = vpop.f32.mrf.mxu0
        %v982 = vadd.f32 %v957, %v981
        %983 = vdwg.mxu0
        %v984 = vmax.f32 %v982, 0.0
        %v986 = vrot.slane %v984, 2
        %v988 = vsel %vm904, %v882, %v986
        %v989 = vld [vmem:[%s15] sm:$0xf]
        %v990 = vld [vmem:[%s16] sm:$0xf]
        %v991 = vld [vmem:[%s17] sm:$0xf]
        %v992 = vld [vmem:[%s18] sm:$0xf]
        %994 = vrot.lane.b32.xlu0 %v988, 1
        %v995 = vpop.permute.xlu0 %994
        %996 = vrot.lane.b32.xlu0 %v986, 1
        %v997 = vpop.permute.xlu0 %996
        %v1000 = vsel %vm624, 0.0, %v995
        %v1001 = vsel %vm624, 0.0, %v997
        %v1002 = vsel %vm893, %v1000, 0.0
        %v1003 = vsel %vm893, %v1001, 0.0
        %v1006 = vrot.slane %v1002, 6
        %v1007 = vrot.slane %v1003, 6
        %v1008 = vsel %vm916, %v1006, %v1007
        %1009 = vrot.lane.b32.xlu0 %v1006, 127
        %v1010 = vpop.permute.xlu0 %1009
        %1011 = vrot.lane.b32.xlu0 %v1008, 127
        %v1012 = vpop.permute.xlu0 %1011
        %v1015 = vrot.slane %v1002, 4
        %v1016 = vrot.slane %v1003, 4
        %v1017 = vsel %vm635, %v1015, %v1016
        %1018 = vrot.lane.b32.xlu0 %v1015, 126
        %v1019 = vpop.permute.xlu0 %1018
        %1020 = vrot.lane.b32.xlu0 %v1017, 126
        %v1021 = vpop.permute.xlu0 %1020
        %v1023 = vsel %vm916, %v1003, %v1010
        %v1024 = vsel %vm635, %v1012, %v1019
        %1026 = vset.pattern.permute.xlu0 0
        %1027 = vperm.xlu0 %1026, %v990
        %v1028 = vpop.permute.xlu0 %1027
        %vm1030 = vcmask 244736
        %v1032 = vsel %vm1030, %v989, 0
        %v1034 = vsel %vm904, %v1021, 0
        %1036 = vmatpush.msra.mxu0 0.0
        %1037 = vmatpush.msra.mxu0 0.0
        %1038 = vmatpush.msra.mxu0 0.0
        %1039 = vmatpush.msra.mxu0 0.0
        %1040 = vmatpush.msra.mxu0 0.0
        %1041 = vmatpush.msra.mxu0 0.0
        %1042 = vmatpush.msra.mxu0 0.0
        %1043 = vmatpush.msra.mxu0 0.0
        %1044 = vmatpush.msra.mxu0 0.0
        %1045 = vmatpush.msra.mxu0 0.0
        %1046 = vmatpush.msra.mxu0 0.0
        %1047 = vmatpush.msra.mxu0 0.0
        %1048 = vmatpush.msra.mxu0 %v1034
        %1049 = vmatpush.msra.mxu0 %v1024
        %1050 = vmatpush.msra.mxu0 %v1023
        %1051 = vmatpush.msra.mxu0 %v1002
        %1052 = vmatmul.f32.gmra.mxu0 %v1032
        %v1053 = vpop.f32.mrf.mxu0
        %v1054 = vadd.f32 %v1028, %v1053
        %1055 = vdwg.mxu0
        %v1056 = vmax.f32 %v1054, 0.0
        %1058 = vrot.lane.b32.xlu0 %v1056, 1
        %v1059 = vpop.permute.xlu0 %1058
        %v1061 = vsel %vm624, 0.0, %v1059
        %v1062 = vsel %vm893, %v1061, 0.0
        %v1064 = vrot.slane %v1062, 4
        %1065 = vrot.lane.b32.xlu0 %v1064, 127
        %v1066 = vpop.permute.xlu0 %1065
        %1068 = vrot.lane.b32.xlu0 %v1062, 126
        %v1069 = vpop.permute.xlu0 %1068
        %v1070 = vsel %vm635, %v1062, %v1066
        %1072 = vset.pattern.permute.xlu0 0
        %1073 = vperm.xlu0 %1072, %v992
        %v1074 = vpop.permute.xlu0 %1073
        %v1077 = vsel %vm642, %v991, 0
        %v1079 = vsel %vm635, %v1069, 0
        %1081 = vmatpush.msra.mxu0 0.0
        %1082 = vmatpush.msra.mxu0 0.0
        %1083 = vmatpush.msra.mxu0 0.0
        %1084 = vmatpush.msra.mxu0 0.0
        %1085 = vmatpush.msra.mxu0 0.0
        %1086 = vmatpush.msra.mxu0 0.0
        %1087 = vmatpush.msra.mxu0 0.0
        %1088 = vmatpush.msra.mxu0 0.0
        %1089 = vmatpush.msra.mxu0 0.0
        %1090 = vmatpush.msra.mxu0 0.0
        %1091 = vmatpush.msra.mxu0 0.0
        %1092 = vmatpush.msra.mxu0 0.0
        %1093 = vmatpush.msra.mxu0 0.0
        %1094 = vmatpush.msra.mxu0 0.0
        %1095 = vmatpush.msra.mxu0 %v1079
        %1096 = vmatpush.msra.mxu0 %v1070
        %1097 = vmatmul.f32.gmra.mxu0 %v1077
        %v1098 = vpop.f32.mrf.mxu0
        %v1099 = vadd.f32 %v1074, %v1098
        %1100 = vdwg.mxu0
        %v1101 = vmax.f32 %v1099, 0.0
        %v1103 = vrot.slane %v1101, 6
        %v1105 = vsel %vm916, %v986, %v1103
        %vm1106 = vcmask 64512
        %1107 = vst.msk [vmem:[%s614] sm:$0xff] %vm1106, %v988
        %vm1108 = vcmask 62464
        %1109 = vst.msk [vmem:[%s614 + $0x8] sm:$0x3f] %vm1108, %v1105
        %p1110 = scmp.lt.s32.totalorder %s31, 1
        %s1111 = scalar_select %p1110, %s31, 1
        %s1112 = smul.addr %s1111, 2
        %s1113 = smul.addr %s1112, 8
        %s1114 = scalar_lea.vmem %s19, %s1113
        // Predicated region
        $region101: #{tpu_custom_call.1} parent=95 // pred_check
          %p1115 = pneg %p453
        $region102: #{tpu_custom_call.1} parent=95 // pred_check_branch
          %1117 = sbr.rel (%p1115) target = $region104
        $region103: #{tpu_custom_call.1} parent=95 // pred_region
          _
        $region104: #{tpu_custom_call.1} parent=95 // pred_fallthru
          _
      $region96: #{tpu_custom_call.1} parent=5 // pred_fallthru
        _
      %p1118 = scmp.le.s32.totalorder 2, %s26
      // Predicated region
      $region105: #{tpu_custom_call.1} parent=5 // pred_check
        %p1119 = pneg %p1118
      $region106: #{tpu_custom_call.1} parent=5 // pred_check_branch
        %1121 = sbr.rel (%p1119) target = $region108
      $region107: #{tpu_custom_call.1} parent=5 // pred_region
        %s1122 = ssub.s32 %s26, 2
        // Predicated region
        $region109: #{tpu_custom_call.1} parent=107 // pred_check
          %p1123 = pneg %p459
        $region110: #{tpu_custom_call.1} parent=107 // pred_check_branch
          %1125 = sbr.rel (%p1123) target = $region112
        $region111: #{tpu_custom_call.1} parent=107 // pred_region
          %p1126 = scmp.lt.s32.totalorder %s32, 1
          %s1127 = scalar_select %p1126, %s32, 1
          %s1128 = smul.addr %s1127, 2
          %s1129 = smul.addr %s1128, 8
          %s1130 = scalar_lea.vmem %s19, %s1129
        $region112: #{tpu_custom_call.1} parent=107 // pred_fallthru
          _
      $region108: #{tpu_custom_call.1} parent=5 // pred_fallthru
        _
    $region6: #{tpu_custom_call.1} parent=1 // loop_footer
      %s30 = sadd.s32 1, %s26
    $region7: #{tpu_custom_call.1} parent=1 // loop_footer_branch
      %25 = sbr.rel target = $region3
    $region8: #{tpu_custom_call.1} parent=1 // loop_exit
      _
    %1131 = vsyncpa [#allocation3], 1
    %s1132 = scalar_lea.sflag [#allocation3], 1
    %1133 = vsyncpa %s1132, 1

</llo_original>
